<compile_context>
chip_gen: v7x
topology: tpu7x:2x2x1
jax: 0.10.0
libtpu: 0.0.40
codegen_flags: <defaults>
</compile_context>

<pallas_src>
import functools

import jax
import jax.numpy as jnp
import numpy as np
from jax.experimental import pallas as pl
from jax.experimental.pallas import tpu as pltpu


# --------------------------------------------------------------------------- #
# Pallas kernel
# --------------------------------------------------------------------------- #
def _dilate_attn_kernel(coords_ref, q_ref, k_ref, v_ref, o_ref, *,
                        kernel_size, dilation, scale, H, W, compute_dtype):
    # coords_ref : (2, N) int32   row / col index of every flattened pixel
    # q_ref      : (gb, hd, N)    gb = (batch*head) groups in this block
    # k_ref      : (gb, hd, N)
    # v_ref      : (gb, hd, N)
    # o_ref      : (gb, hd, N)
    gb, hd, N = q_ref.shape
    pad = dilation * (kernel_size - 1) // 2
    f32 = jnp.float32

    row = coords_ref[0:1, :]                  # (1, N) int32
    col = coords_ref[1:2, :]                  # (1, N) int32

    # scale applied once to q (hd muls instead of kernel_size**2 muls per pixel)
    q = (q_ref[...].astype(f32) * scale).astype(compute_dtype)
    k = k_ref[...].astype(compute_dtype)
    v = v_ref[...].astype(compute_dtype)

    m = None        # running max            (gb, N) f32
    l = None        # running exp-sum        (gb, N) f32
    acc = None      # running weighted V sum (gb, hd, N) f32
    first = True

    for di in range(kernel_size):
        dr = di * dilation - pad
        for dj in range(kernel_size):
            dc = dj * dilation - pad
            off = dr * W + dc                 # flattened neighbour offset

            # shifted views: y[..., n] = x[..., (n + off) mod N]; the wrap-around
            # elements are exactly the out-of-image ones and are masked below.
            if off == 0:
                k_pos, v_pos = k, v
            else:
                shift = (-off) % N
                k_pos = pltpu.roll(k, shift, 2)
                v_pos = pltpu.roll(v, shift, 2)

            # border validity (nn.Unfold zero padding): only the non-trivial
            # comparisons are emitted for this (dr, dc).
            conds = []
            if dr < 0:
                conds.append(row >= -dr)
            if dr > 0:
                conds.append(row < H - dr)
            if dc < 0:
                conds.append(col >= -dc)
            if dc > 0:
                conds.append(col < W - dc)
            valid = None
            for c in conds:
                valid = c if valid is None else (valid & c)

            # score; zero-padded keys outside the image give a score of exactly 0
            s = jnp.sum((q * k_pos).astype(f32), axis=1)          # (gb, N)
            if valid is not None:
                s = jnp.where(valid, s, 0.0)

            if first:
                m = s
                p = jnp.ones_like(s)                               # exp(s - s) == 1
                l = p
                pm = p if valid is None else jnp.where(valid, p, 0.0)
                acc = (pm.astype(compute_dtype)[:, None, :] * v_pos).astype(f32)
                first = False
            else:
                m_new = jnp.maximum(m, s)
                alpha = jnp.exp(m - m_new)
                p = jnp.exp(s - m_new)
                l = alpha * l + p
                pm = p if valid is None else jnp.where(valid, p, 0.0)
                acc = (acc * alpha[:, None, :]
                       + (pm.astype(compute_dtype)[:, None, :] * v_pos).astype(f32))
                m = m_new

    inv = pl.reciprocal(l, approx=False)       # exact; only once per output pixel
    o_ref[...] = (acc * inv[:, None, :]).astype(o_ref.dtype)


# --------------------------------------------------------------------------- #
# Tiling heuristics (generation aware)
# --------------------------------------------------------------------------- #
def _vmem_capacity_bytes():
    try:
        return int(pltpu.get_tpu_info().vmem_capacity_bytes)
    except Exception:
        return 64 * 1024 * 1024    # conservative fallback (v7x per-TC size)


def _pick_groups_per_block(G, per_group_bytes, budget_bytes):
    """Largest divisor of G that fits the budget, keeping >=2 parallel blocks."""
    cap = max(1, int(budget_bytes // max(per_group_bytes, 1)))
    if G >= 2:
        cap = min(cap, G // 2)     # >=2 blocks on the parallel axis (megacore / v7x)
    cap = max(cap, 1)
    gb = 1
    for cand in range(1, min(G, cap) + 1):
        if G % cand == 0:
            gb = cand
    return gb


# --------------------------------------------------------------------------- #
# Wrapper
# --------------------------------------------------------------------------- #
def dilate_attention(q, k, v, head_dim, kernel_size=3, dilation=1, qk_scale=None,
                     groups_per_block=None, compute_dtype=None,
                     vmem_limit_bytes=None):
    """Pallas implementation of DilateAttention.forward.

    q, k, v: (B, d, H, W) arrays (NCHW, like PyTorch).  Returns (B, H, W, d).
    """
    B, d, H, W = q.shape
    assert d % head_dim == 0
    assert kernel_size % 2 == 1, "kernel_size must be odd (as in the PyTorch module)"
    nh = d // head_dim
    G = B * nh
    N = H * W
    scale = float(qk_scale) if qk_scale is not None else float(head_dim) ** (-0.5)

    if compute_dtype is None:
        # bf16 products pay off on v6e/v7x (bf16 VPU/EUP); keep f32 for f32 inputs so
        # numerics match the reference, and because v5e has no bf16 VPU.
        compute_dtype = jnp.bfloat16 if q.dtype == jnp.bfloat16 else jnp.float32

    # Free layout changes only (contiguous reshapes): no pad / unfold / stack in HBM.
    q_g = q.reshape(G, head_dim, N)
    k_g = k.reshape(G, head_dim, N)
    v_g = v.reshape(G, head_dim, N)

    # (2, N) int32 pixel coordinates for the in-kernel border masks (tiny).
    rows = jnp.repeat(jnp.arange(H, dtype=jnp.int32), W)
    cols = jnp.tile(jnp.arange(W, dtype=jnp.int32), H)
    coords = jnp.stack([rows, cols], axis=0)

    # ---- pick groups-per-block against a generation-aware VMEM budget ------------
    cap = _vmem_capacity_bytes()
    isz = q.dtype.itemsize
    per_group = (8 * head_dim * N * isz     # q,k,v,o blocks, 2x pipeline buffering
                 + 6 * head_dim * N * 4     # f32 temporaries: loads, rolled copies, acc
                 + 10 * N * 4)              # (gb, N)-sized softmax temporaries
    if groups_per_block is None:
        groups_per_block = _pick_groups_per_block(G, per_group, int(cap * 0.45))
    gb = groups_per_block
    assert G % gb == 0
    # TODO(synk): for very large head_dim*H*W (a single-group block exceeding VMEM)
    # add a row-tiled variant with haloed K/V windows fetched by manual DMA.

    if vmem_limit_bytes is None:
        vmem_limit_bytes = max(32 * 1024 * 1024,
                               min(int(cap * 0.75), 112 * 1024 * 1024))

    kernel = functools.partial(_dilate_attn_kernel, kernel_size=kernel_size,
                               dilation=dilation, scale=scale, H=H, W=W,
                               compute_dtype=compute_dtype)

    out_g = pl.pallas_call(
        kernel,
        out_shape=jax.ShapeDtypeStruct((G, head_dim, N), q.dtype),
        grid_spec=pltpu.PrefetchScalarGridSpec(
            num_scalar_prefetch=0,
            grid=(G // gb,),
            in_specs=[
                pl.BlockSpec((2, N), lambda g: (0, 0)),
                pl.BlockSpec((gb, head_dim, N), lambda g: (g, 0, 0)),
                pl.BlockSpec((gb, head_dim, N), lambda g: (g, 0, 0)),
                pl.BlockSpec((gb, head_dim, N), lambda g: (g, 0, 0)),
            ],
            out_specs=pl.BlockSpec((gb, head_dim, N), lambda g: (g, 0, 0)),
        ),
        compiler_params=pltpu.CompilerParams(
            dimension_semantics=("parallel",),
            vmem_limit_bytes=vmem_limit_bytes),
    )(coords, q_g, k_g, v_g)

    # (G, hd, N) -> (B, nh, hd, H, W) -> (B, H, W, nh, hd) -> (B, H, W, d)
    # TODO(synk): when nh*head_dim >= 128, emit (B, N, d) directly from the kernel
    # (in-kernel transpose via pltpu.einshape) to remove this extra HBM round trip;
    # for small d the N-as-lanes layout + XLA transpose is the lane-dense choice.
    out = out_g.reshape(B, nh, head_dim, H, W)
    out = jnp.transpose(out, (0, 3, 4, 1, 2)).reshape(B, H, W, d)
    return out


# --------------------------------------------------------------------------- #
# Pure-JAX reference (mirrors the PyTorch forward) for verification
# --------------------------------------------------------------------------- #
def _unfold_nchw(x, kernel_size, dilation):
    """nn.Unfold(kernel_size, dilation, pad=dilation*(k-1)//2, stride=1)."""
    B, C, H, W = x.shape
    pad = dilation * (kernel_size - 1) // 2
    xp = jnp.pad(x, ((0, 0), (0, 0), (pad, pad), (pad, pad)))
    patches = []
    for i in range(kernel_size):
        for j in range(kernel_size):
            patches.append(
                xp[:, :, i * dilation:i * dilation + H, j * dilation:j * dilation + W])
    return jnp.stack(patches, axis=2)  # (B, C, k*k, H, W)


def dilate_attention_ref(q, k, v, head_dim, kernel_size=3, dilation=1, qk_scale=None):
    B, d, H, W = q.shape
    nh = d // head_dim
    kk = kernel_size * kernel_size
    N = H * W
    scale = qk_scale if qk_scale is not None else head_dim ** (-0.5)

    qr = q.reshape(B, nh, head_dim, 1, N).transpose(0, 1, 4, 3, 2)     # (B,nh,N,1,hd)
    ku = _unfold_nchw(k, kernel_size, dilation).reshape(B, nh, head_dim, kk, N)
    ku = ku.transpose(0, 1, 4, 2, 3)                                   # (B,nh,N,hd,kk)
    attn = jnp.matmul(qr, ku) * scale                                  # (B,nh,N,1,kk)
    attn = jax.nn.softmax(attn, axis=-1)
    # TODO(synk): attn_drop (nn.Dropout) is identity at the module default p=0 and is
    # not implemented for p > 0.
    vu = _unfold_nchw(v, kernel_size, dilation).reshape(B, nh, head_dim, kk, N)
    vu = vu.transpose(0, 1, 4, 3, 2)                                   # (B,nh,N,kk,hd)
    x = jnp.matmul(attn, vu)                                           # (B,nh,N,1,hd)
    x = x.transpose(0, 2, 1, 3, 4).reshape(B, H, W, d)
    return x


# --------------------------------------------------------------------------- #
if __name__ == "__main__":
    # Small shapes consistent with the module: B=2, d=16 channels, H=W=16,
    # head_dim=4 -> 4 heads, kernel_size=3.  attn_drop=0 (identity).
    B, d, H, W = 2, 16, 16, 16
    head_dim = 4

    key = jax.random.PRNGKey(0)
    kq, kk_, kv = jax.random.split(key, 3)
    q = jax.random.normal(kq, (B, d, H, W), dtype=jnp.float32)
    k = jax.random.normal(kk_, (B, d, H, W), dtype=jnp.float32)
    v = jax.random.normal(kv, (B, d, H, W), dtype=jnp.float32)

    # dilation = 1
    fn1 = jax.jit(functools.partial(dilate_attention, head_dim=head_dim,
                                    kernel_size=3, dilation=1))
    out = jax.block_until_ready(fn1(q, k, v))
    ref = jax.block_until_ready(
        dilate_attention_ref(q, k, v, head_dim, kernel_size=3, dilation=1))
    np.testing.assert_allclose(np.asarray(out), np.asarray(ref), rtol=2e-3, atol=2e-3)
    assert out.shape == (B, H, W, d)

    # dilation = 2 (exercises the dilated offsets / wider border masks)
    fn2 = jax.jit(functools.partial(dilate_attention, head_dim=head_dim,
                                    kernel_size=3, dilation=2))
    out2 = jax.block_until_ready(fn2(q, k, v))
    ref2 = jax.block_until_ready(
        dilate_attention_ref(q, k, v, head_dim, kernel_size=3, dilation=2))
    np.testing.assert_allclose(np.asarray(out2), np.asarray(ref2), rtol=2e-3, atol=2e-3)

    print("KERNEL_OK")
</pallas_src>

<mosaic_0001>
module attributes {stable_mosaic.version = 11 : i64} {
  func.func @_dilate_attn_kernel(%arg0: i32, %arg1: memref<2x256xi32, #tpu.memory_space<vmem>>, %arg2: memref<4x4x256xf32, #tpu.memory_space<vmem>>, %arg3: memref<4x4x256xf32, #tpu.memory_space<vmem>>, %arg4: memref<4x4x256xf32, #tpu.memory_space<vmem>>, %arg5: memref<4x4x256xf32, #tpu.memory_space<vmem>>) attributes {dimension_semantics = [#tpu.dimension_semantics<parallel>], iteration_bounds = array<i64: 2>, scalar_prefetch = 0 : i64, scratch_operands = 0 : i64, tpu.core_type = #tpu.core_type<tc>, window_params = [{pipeline_mode = #tpu.pipeline_mode<synchronous>, transform_indices = @transform_0, window_bounds = array<i64: 2, 256>}, {transform_indices = @transform_1, window_bounds = array<i64: 4, 4, 256>}, {transform_indices = @transform_2, window_bounds = array<i64: 4, 4, 256>}, {transform_indices = @transform_3, window_bounds = array<i64: 4, 4, 256>}, {transform_indices = @transform_4, window_bounds = array<i64: 4, 4, 256>}]} {
    %c0 = arith.constant 0 : index
    %c0_0 = arith.constant 0 : index
    %0 = vector.load %arg1[%c0, %c0_0] : memref<2x256xi32, #tpu.memory_space<vmem>>, vector<1x256xi32>
    %c1 = arith.constant 1 : index
    %c0_1 = arith.constant 0 : index
    %1 = vector.load %arg1[%c1, %c0_1] : memref<2x256xi32, #tpu.memory_space<vmem>>, vector<1x256xi32>
    %c0_2 = arith.constant 0 : index
    %c0_3 = arith.constant 0 : index
    %c0_4 = arith.constant 0 : index
    %2 = vector.load %arg2[%c0_2, %c0_3, %c0_4] : memref<4x4x256xf32, #tpu.memory_space<vmem>>, vector<4x4x256xf32>
    %cst = arith.constant 5.000000e-01 : f32
    %3 = vector.broadcast %cst : f32 to vector<4x4x256xf32>
    %4 = arith.mulf %2, %3 : vector<4x4x256xf32>
    %c0_5 = arith.constant 0 : index
    %c0_6 = arith.constant 0 : index
    %c0_7 = arith.constant 0 : index
    %5 = vector.load %arg3[%c0_5, %c0_6, %c0_7] : memref<4x4x256xf32, #tpu.memory_space<vmem>>, vector<4x4x256xf32>
    %c0_8 = arith.constant 0 : index
    %c0_9 = arith.constant 0 : index
    %c0_10 = arith.constant 0 : index
    %6 = vector.load %arg4[%c0_8, %c0_9, %c0_10] : memref<4x4x256xf32, #tpu.memory_space<vmem>>, vector<4x4x256xf32>
    %c17_i32 = arith.constant 17 : i32
    %7 = tpu.dynamic_rotate %5 by %c17_i32 dim 2 : vector<4x4x256xf32>, i32 -> vector<4x4x256xf32>
    %c17_i32_11 = arith.constant 17 : i32
    %8 = tpu.dynamic_rotate %6 by %c17_i32_11 dim 2 : vector<4x4x256xf32>, i32 -> vector<4x4x256xf32>
    %c1_i32 = arith.constant 1 : i32
    %9 = vector.broadcast %c1_i32 : i32 to vector<1x256xi32>
    %10 = arith.cmpi sge, %0, %9 : vector<1x256xi32>
    %c1_i32_12 = arith.constant 1 : i32
    %11 = vector.broadcast %c1_i32_12 : i32 to vector<1x256xi32>
    %12 = arith.cmpi sge, %1, %11 : vector<1x256xi32>
    %13 = arith.andi %10, %12 : vector<1x256xi1>
    %14 = arith.mulf %4, %7 : vector<4x4x256xf32>
    %cst_13 = arith.constant dense<0.000000e+00> : vector<4x256xf32>
    %15 = vector.multi_reduction <add>, %14, %cst_13 [1] : vector<4x4x256xf32> to vector<4x256xf32>
    %cst_14 = arith.constant 0.000000e+00 : f32
    %16 = vector.shape_cast %13 : vector<1x256xi1> to vector<1x256xi1>
    %17 = vector.broadcast %16 : vector<1x256xi1> to vector<4x256xi1>
    %18 = vector.broadcast %cst_14 : f32 to vector<4x256xf32>
    %19 = arith.select %17, %15, %18 : vector<4x256xi1>, vector<4x256xf32>
    %cst_15 = arith.constant 1.000000e+00 : f32
    %20 = vector.broadcast %cst_15 : f32 to vector<4x256xf32>
    %cst_16 = arith.constant 0.000000e+00 : f32
    %21 = vector.shape_cast %13 : vector<1x256xi1> to vector<1x256xi1>
    %22 = vector.broadcast %21 : vector<1x256xi1> to vector<4x256xi1>
    %23 = vector.broadcast %cst_16 : f32 to vector<4x256xf32>
    %24 = arith.select %22, %20, %23 : vector<4x256xi1>, vector<4x256xf32>
    %25 = vector.shape_cast %24 : vector<4x256xf32> to vector<4x1x256xf32>
    %26 = vector.broadcast %25 : vector<4x1x256xf32> to vector<4x4x256xf32>
    %27 = arith.mulf %26, %8 : vector<4x4x256xf32>
    %c16_i32 = arith.constant 16 : i32
    %28 = tpu.dynamic_rotate %5 by %c16_i32 dim 2 : vector<4x4x256xf32>, i32 -> vector<4x4x256xf32>
    %c16_i32_17 = arith.constant 16 : i32
    %29 = tpu.dynamic_rotate %6 by %c16_i32_17 dim 2 : vector<4x4x256xf32>, i32 -> vector<4x4x256xf32>
    %c1_i32_18 = arith.constant 1 : i32
    %30 = vector.broadcast %c1_i32_18 : i32 to vector<1x256xi32>
    %31 = arith.cmpi sge, %0, %30 : vector<1x256xi32>
    %32 = arith.mulf %4, %28 : vector<4x4x256xf32>
    %cst_19 = arith.constant dense<0.000000e+00> : vector<4x256xf32>
    %33 = vector.multi_reduction <add>, %32, %cst_19 [1] : vector<4x4x256xf32> to vector<4x256xf32>
    %cst_20 = arith.constant 0.000000e+00 : f32
    %34 = vector.shape_cast %31 : vector<1x256xi1> to vector<1x256xi1>
    %35 = vector.broadcast %34 : vector<1x256xi1> to vector<4x256xi1>
    %36 = vector.broadcast %cst_20 : f32 to vector<4x256xf32>
    %37 = arith.select %35, %33, %36 : vector<4x256xi1>, vector<4x256xf32>
    %38 = arith.maximumf %19, %37 : vector<4x256xf32>
    %39 = arith.subf %19, %38 : vector<4x256xf32>
    %40 = math.exp %39 : vector<4x256xf32>
    %41 = arith.subf %37, %38 : vector<4x256xf32>
    %42 = math.exp %41 : vector<4x256xf32>
    %43 = arith.mulf %40, %20 : vector<4x256xf32>
    %44 = arith.addf %43, %42 : vector<4x256xf32>
    %cst_21 = arith.constant 0.000000e+00 : f32
    %45 = vector.shape_cast %31 : vector<1x256xi1> to vector<1x256xi1>
    %46 = vector.broadcast %45 : vector<1x256xi1> to vector<4x256xi1>
    %47 = vector.broadcast %cst_21 : f32 to vector<4x256xf32>
    %48 = arith.select %46, %42, %47 : vector<4x256xi1>, vector<4x256xf32>
    %49 = vector.shape_cast %40 : vector<4x256xf32> to vector<4x1x256xf32>
    %50 = vector.broadcast %49 : vector<4x1x256xf32> to vector<4x4x256xf32>
    %51 = arith.mulf %27, %50 : vector<4x4x256xf32>
    %52 = vector.shape_cast %48 : vector<4x256xf32> to vector<4x1x256xf32>
    %53 = vector.broadcast %52 : vector<4x1x256xf32> to vector<4x4x256xf32>
    %54 = arith.mulf %53, %29 : vector<4x4x256xf32>
    %55 = arith.addf %51, %54 : vector<4x4x256xf32>
    %c15_i32 = arith.constant 15 : i32
    %56 = tpu.dynamic_rotate %5 by %c15_i32 dim 2 : vector<4x4x256xf32>, i32 -> vector<4x4x256xf32>
    %c15_i32_22 = arith.constant 15 : i32
    %57 = tpu.dynamic_rotate %6 by %c15_i32_22 dim 2 : vector<4x4x256xf32>, i32 -> vector<4x4x256xf32>
    %c1_i32_23 = arith.constant 1 : i32
    %58 = vector.broadcast %c1_i32_23 : i32 to vector<1x256xi32>
    %59 = arith.cmpi sge, %0, %58 : vector<1x256xi32>
    %c15_i32_24 = arith.constant 15 : i32
    %60 = vector.broadcast %c15_i32_24 : i32 to vector<1x256xi32>
    %61 = arith.cmpi slt, %1, %60 : vector<1x256xi32>
    %62 = arith.andi %59, %61 : vector<1x256xi1>
    %63 = arith.mulf %4, %56 : vector<4x4x256xf32>
    %cst_25 = arith.constant dense<0.000000e+00> : vector<4x256xf32>
    %64 = vector.multi_reduction <add>, %63, %cst_25 [1] : vector<4x4x256xf32> to vector<4x256xf32>
    %cst_26 = arith.constant 0.000000e+00 : f32
    %65 = vector.shape_cast %62 : vector<1x256xi1> to vector<1x256xi1>
    %66 = vector.broadcast %65 : vector<1x256xi1> to vector<4x256xi1>
    %67 = vector.broadcast %cst_26 : f32 to vector<4x256xf32>
    %68 = arith.select %66, %64, %67 : vector<4x256xi1>, vector<4x256xf32>
    %69 = arith.maximumf %38, %68 : vector<4x256xf32>
    %70 = arith.subf %38, %69 : vector<4x256xf32>
    %71 = math.exp %70 : vector<4x256xf32>
    %72 = arith.subf %68, %69 : vector<4x256xf32>
    %73 = math.exp %72 : vector<4x256xf32>
    %74 = arith.mulf %71, %44 : vector<4x256xf32>
    %75 = arith.addf %74, %73 : vector<4x256xf32>
    %cst_27 = arith.constant 0.000000e+00 : f32
    %76 = vector.shape_cast %62 : vector<1x256xi1> to vector<1x256xi1>
    %77 = vector.broadcast %76 : vector<1x256xi1> to vector<4x256xi1>
    %78 = vector.broadcast %cst_27 : f32 to vector<4x256xf32>
    %79 = arith.select %77, %73, %78 : vector<4x256xi1>, vector<4x256xf32>
    %80 = vector.shape_cast %71 : vector<4x256xf32> to vector<4x1x256xf32>
    %81 = vector.broadcast %80 : vector<4x1x256xf32> to vector<4x4x256xf32>
    %82 = arith.mulf %55, %81 : vector<4x4x256xf32>
    %83 = vector.shape_cast %79 : vector<4x256xf32> to vector<4x1x256xf32>
    %84 = vector.broadcast %83 : vector<4x1x256xf32> to vector<4x4x256xf32>
    %85 = arith.mulf %84, %57 : vector<4x4x256xf32>
    %86 = arith.addf %82, %85 : vector<4x4x256xf32>
    %c1_i32_28 = arith.constant 1 : i32
    %87 = tpu.dynamic_rotate %5 by %c1_i32_28 dim 2 : vector<4x4x256xf32>, i32 -> vector<4x4x256xf32>
    %c1_i32_29 = arith.constant 1 : i32
    %88 = tpu.dynamic_rotate %6 by %c1_i32_29 dim 2 : vector<4x4x256xf32>, i32 -> vector<4x4x256xf32>
    %c1_i32_30 = arith.constant 1 : i32
    %89 = vector.broadcast %c1_i32_30 : i32 to vector<1x256xi32>
    %90 = arith.cmpi sge, %1, %89 : vector<1x256xi32>
    %91 = arith.mulf %4, %87 : vector<4x4x256xf32>
    %cst_31 = arith.constant dense<0.000000e+00> : vector<4x256xf32>
    %92 = vector.multi_reduction <add>, %91, %cst_31 [1] : vector<4x4x256xf32> to vector<4x256xf32>
    %cst_32 = arith.constant 0.000000e+00 : f32
    %93 = vector.shape_cast %90 : vector<1x256xi1> to vector<1x256xi1>
    %94 = vector.broadcast %93 : vector<1x256xi1> to vector<4x256xi1>
    %95 = vector.broadcast %cst_32 : f32 to vector<4x256xf32>
    %96 = arith.select %94, %92, %95 : vector<4x256xi1>, vector<4x256xf32>
    %97 = arith.maximumf %69, %96 : vector<4x256xf32>
    %98 = arith.subf %69, %97 : vector<4x256xf32>
    %99 = math.exp %98 : vector<4x256xf32>
    %100 = arith.subf %96, %97 : vector<4x256xf32>
    %101 = math.exp %100 : vector<4x256xf32>
    %102 = arith.mulf %99, %75 : vector<4x256xf32>
    %103 = arith.addf %102, %101 : vector<4x256xf32>
    %cst_33 = arith.constant 0.000000e+00 : f32
    %104 = vector.shape_cast %90 : vector<1x256xi1> to vector<1x256xi1>
    %105 = vector.broadcast %104 : vector<1x256xi1> to vector<4x256xi1>
    %106 = vector.broadcast %cst_33 : f32 to vector<4x256xf32>
    %107 = arith.select %105, %101, %106 : vector<4x256xi1>, vector<4x256xf32>
    %108 = vector.shape_cast %99 : vector<4x256xf32> to vector<4x1x256xf32>
    %109 = vector.broadcast %108 : vector<4x1x256xf32> to vector<4x4x256xf32>
    %110 = arith.mulf %86, %109 : vector<4x4x256xf32>
    %111 = vector.shape_cast %107 : vector<4x256xf32> to vector<4x1x256xf32>
    %112 = vector.broadcast %111 : vector<4x1x256xf32> to vector<4x4x256xf32>
    %113 = arith.mulf %112, %88 : vector<4x4x256xf32>
    %114 = arith.addf %110, %113 : vector<4x4x256xf32>
    %115 = arith.mulf %4, %5 : vector<4x4x256xf32>
    %cst_34 = arith.constant dense<0.000000e+00> : vector<4x256xf32>
    %116 = vector.multi_reduction <add>, %115, %cst_34 [1] : vector<4x4x256xf32> to vector<4x256xf32>
    %117 = arith.maximumf %97, %116 : vector<4x256xf32>
    %118 = arith.subf %97, %117 : vector<4x256xf32>
    %119 = math.exp %118 : vector<4x256xf32>
    %120 = arith.subf %116, %117 : vector<4x256xf32>
    %121 = math.exp %120 : vector<4x256xf32>
    %122 = arith.mulf %119, %103 : vector<4x256xf32>
    %123 = arith.addf %122, %121 : vector<4x256xf32>
    %124 = vector.shape_cast %119 : vector<4x256xf32> to vector<4x1x256xf32>
    %125 = vector.broadcast %124 : vector<4x1x256xf32> to vector<4x4x256xf32>
    %126 = arith.mulf %114, %125 : vector<4x4x256xf32>
    %127 = vector.shape_cast %121 : vector<4x256xf32> to vector<4x1x256xf32>
    %128 = vector.broadcast %127 : vector<4x1x256xf32> to vector<4x4x256xf32>
    %129 = arith.mulf %128, %6 : vector<4x4x256xf32>
    %130 = arith.addf %126, %129 : vector<4x4x256xf32>
    %c255_i32 = arith.constant 255 : i32
    %131 = tpu.dynamic_rotate %5 by %c255_i32 dim 2 : vector<4x4x256xf32>, i32 -> vector<4x4x256xf32>
    %c255_i32_35 = arith.constant 255 : i32
    %132 = tpu.dynamic_rotate %6 by %c255_i32_35 dim 2 : vector<4x4x256xf32>, i32 -> vector<4x4x256xf32>
    %c15_i32_36 = arith.constant 15 : i32
    %133 = vector.broadcast %c15_i32_36 : i32 to vector<1x256xi32>
    %134 = arith.cmpi slt, %1, %133 : vector<1x256xi32>
    %135 = arith.mulf %4, %131 : vector<4x4x256xf32>
    %cst_37 = arith.constant dense<0.000000e+00> : vector<4x256xf32>
    %136 = vector.multi_reduction <add>, %135, %cst_37 [1] : vector<4x4x256xf32> to vector<4x256xf32>
    %cst_38 = arith.constant 0.000000e+00 : f32
    %137 = vector.shape_cast %134 : vector<1x256xi1> to vector<1x256xi1>
    %138 = vector.broadcast %137 : vector<1x256xi1> to vector<4x256xi1>
    %139 = vector.broadcast %cst_38 : f32 to vector<4x256xf32>
    %140 = arith.select %138, %136, %139 : vector<4x256xi1>, vector<4x256xf32>
    %141 = arith.maximumf %117, %140 : vector<4x256xf32>
    %142 = arith.subf %117, %141 : vector<4x256xf32>
    %143 = math.exp %142 : vector<4x256xf32>
    %144 = arith.subf %140, %141 : vector<4x256xf32>
    %145 = math.exp %144 : vector<4x256xf32>
    %146 = arith.mulf %143, %123 : vector<4x256xf32>
    %147 = arith.addf %146, %145 : vector<4x256xf32>
    %cst_39 = arith.constant 0.000000e+00 : f32
    %148 = vector.shape_cast %134 : vector<1x256xi1> to vector<1x256xi1>
    %149 = vector.broadcast %148 : vector<1x256xi1> to vector<4x256xi1>
    %150 = vector.broadcast %cst_39 : f32 to vector<4x256xf32>
    %151 = arith.select %149, %145, %150 : vector<4x256xi1>, vector<4x256xf32>
    %152 = vector.shape_cast %143 : vector<4x256xf32> to vector<4x1x256xf32>
    %153 = vector.broadcast %152 : vector<4x1x256xf32> to vector<4x4x256xf32>
    %154 = arith.mulf %130, %153 : vector<4x4x256xf32>
    %155 = vector.shape_cast %151 : vector<4x256xf32> to vector<4x1x256xf32>
    %156 = vector.broadcast %155 : vector<4x1x256xf32> to vector<4x4x256xf32>
    %157 = arith.mulf %156, %132 : vector<4x4x256xf32>
    %158 = arith.addf %154, %157 : vector<4x4x256xf32>
    %c241_i32 = arith.constant 241 : i32
    %159 = tpu.dynamic_rotate %5 by %c241_i32 dim 2 : vector<4x4x256xf32>, i32 -> vector<4x4x256xf32>
    %c241_i32_40 = arith.constant 241 : i32
    %160 = tpu.dynamic_rotate %6 by %c241_i32_40 dim 2 : vector<4x4x256xf32>, i32 -> vector<4x4x256xf32>
    %c15_i32_41 = arith.constant 15 : i32
    %161 = vector.broadcast %c15_i32_41 : i32 to vector<1x256xi32>
    %162 = arith.cmpi slt, %0, %161 : vector<1x256xi32>
    %c1_i32_42 = arith.constant 1 : i32
    %163 = vector.broadcast %c1_i32_42 : i32 to vector<1x256xi32>
    %164 = arith.cmpi sge, %1, %163 : vector<1x256xi32>
    %165 = arith.andi %162, %164 : vector<1x256xi1>
    %166 = arith.mulf %4, %159 : vector<4x4x256xf32>
    %cst_43 = arith.constant dense<0.000000e+00> : vector<4x256xf32>
    %167 = vector.multi_reduction <add>, %166, %cst_43 [1] : vector<4x4x256xf32> to vector<4x256xf32>
    %cst_44 = arith.constant 0.000000e+00 : f32
    %168 = vector.shape_cast %165 : vector<1x256xi1> to vector<1x256xi1>
    %169 = vector.broadcast %168 : vector<1x256xi1> to vector<4x256xi1>
    %170 = vector.broadcast %cst_44 : f32 to vector<4x256xf32>
    %171 = arith.select %169, %167, %170 : vector<4x256xi1>, vector<4x256xf32>
    %172 = arith.maximumf %141, %171 : vector<4x256xf32>
    %173 = arith.subf %141, %172 : vector<4x256xf32>
    %174 = math.exp %173 : vector<4x256xf32>
    %175 = arith.subf %171, %172 : vector<4x256xf32>
    %176 = math.exp %175 : vector<4x256xf32>
    %177 = arith.mulf %174, %147 : vector<4x256xf32>
    %178 = arith.addf %177, %176 : vector<4x256xf32>
    %cst_45 = arith.constant 0.000000e+00 : f32
    %179 = vector.shape_cast %165 : vector<1x256xi1> to vector<1x256xi1>
    %180 = vector.broadcast %179 : vector<1x256xi1> to vector<4x256xi1>
    %181 = vector.broadcast %cst_45 : f32 to vector<4x256xf32>
    %182 = arith.select %180, %176, %181 : vector<4x256xi1>, vector<4x256xf32>
    %183 = vector.shape_cast %174 : vector<4x256xf32> to vector<4x1x256xf32>
    %184 = vector.broadcast %183 : vector<4x1x256xf32> to vector<4x4x256xf32>
    %185 = arith.mulf %158, %184 : vector<4x4x256xf32>
    %186 = vector.shape_cast %182 : vector<4x256xf32> to vector<4x1x256xf32>
    %187 = vector.broadcast %186 : vector<4x1x256xf32> to vector<4x4x256xf32>
    %188 = arith.mulf %187, %160 : vector<4x4x256xf32>
    %189 = arith.addf %185, %188 : vector<4x4x256xf32>
    %c240_i32 = arith.constant 240 : i32
    %190 = tpu.dynamic_rotate %5 by %c240_i32 dim 2 : vector<4x4x256xf32>, i32 -> vector<4x4x256xf32>
    %c240_i32_46 = arith.constant 240 : i32
    %191 = tpu.dynamic_rotate %6 by %c240_i32_46 dim 2 : vector<4x4x256xf32>, i32 -> vector<4x4x256xf32>
    %c15_i32_47 = arith.constant 15 : i32
    %192 = vector.broadcast %c15_i32_47 : i32 to vector<1x256xi32>
    %193 = arith.cmpi slt, %0, %192 : vector<1x256xi32>
    %194 = arith.mulf %4, %190 : vector<4x4x256xf32>
    %cst_48 = arith.constant dense<0.000000e+00> : vector<4x256xf32>
    %195 = vector.multi_reduction <add>, %194, %cst_48 [1] : vector<4x4x256xf32> to vector<4x256xf32>
    %cst_49 = arith.constant 0.000000e+00 : f32
    %196 = vector.shape_cast %193 : vector<1x256xi1> to vector<1x256xi1>
    %197 = vector.broadcast %196 : vector<1x256xi1> to vector<4x256xi1>
    %198 = vector.broadcast %cst_49 : f32 to vector<4x256xf32>
    %199 = arith.select %197, %195, %198 : vector<4x256xi1>, vector<4x256xf32>
    %200 = arith.maximumf %172, %199 : vector<4x256xf32>
    %201 = arith.subf %172, %200 : vector<4x256xf32>
    %202 = math.exp %201 : vector<4x256xf32>
    %203 = arith.subf %199, %200 : vector<4x256xf32>
    %204 = math.exp %203 : vector<4x256xf32>
    %205 = arith.mulf %202, %178 : vector<4x256xf32>
    %206 = arith.addf %205, %204 : vector<4x256xf32>
    %cst_50 = arith.constant 0.000000e+00 : f32
    %207 = vector.shape_cast %193 : vector<1x256xi1> to vector<1x256xi1>
    %208 = vector.broadcast %207 : vector<1x256xi1> to vector<4x256xi1>
    %209 = vector.broadcast %cst_50 : f32 to vector<4x256xf32>
    %210 = arith.select %208, %204, %209 : vector<4x256xi1>, vector<4x256xf32>
    %211 = vector.shape_cast %202 : vector<4x256xf32> to vector<4x1x256xf32>
    %212 = vector.broadcast %211 : vector<4x1x256xf32> to vector<4x4x256xf32>
    %213 = arith.mulf %189, %212 : vector<4x4x256xf32>
    %214 = vector.shape_cast %210 : vector<4x256xf32> to vector<4x1x256xf32>
    %215 = vector.broadcast %214 : vector<4x1x256xf32> to vector<4x4x256xf32>
    %216 = arith.mulf %215, %191 : vector<4x4x256xf32>
    %217 = arith.addf %213, %216 : vector<4x4x256xf32>
    %c239_i32 = arith.constant 239 : i32
    %218 = tpu.dynamic_rotate %5 by %c239_i32 dim 2 : vector<4x4x256xf32>, i32 -> vector<4x4x256xf32>
    %c239_i32_51 = arith.constant 239 : i32
    %219 = tpu.dynamic_rotate %6 by %c239_i32_51 dim 2 : vector<4x4x256xf32>, i32 -> vector<4x4x256xf32>
    %c15_i32_52 = arith.constant 15 : i32
    %220 = vector.broadcast %c15_i32_52 : i32 to vector<1x256xi32>
    %221 = arith.cmpi slt, %0, %220 : vector<1x256xi32>
    %c15_i32_53 = arith.constant 15 : i32
    %222 = vector.broadcast %c15_i32_53 : i32 to vector<1x256xi32>
    %223 = arith.cmpi slt, %1, %222 : vector<1x256xi32>
    %224 = arith.andi %221, %223 : vector<1x256xi1>
    %225 = arith.mulf %4, %218 : vector<4x4x256xf32>
    %cst_54 = arith.constant dense<0.000000e+00> : vector<4x256xf32>
    %226 = vector.multi_reduction <add>, %225, %cst_54 [1] : vector<4x4x256xf32> to vector<4x256xf32>
    %cst_55 = arith.constant 0.000000e+00 : f32
    %227 = vector.shape_cast %224 : vector<1x256xi1> to vector<1x256xi1>
    %228 = vector.broadcast %227 : vector<1x256xi1> to vector<4x256xi1>
    %229 = vector.broadcast %cst_55 : f32 to vector<4x256xf32>
    %230 = arith.select %228, %226, %229 : vector<4x256xi1>, vector<4x256xf32>
    %231 = arith.maximumf %200, %230 : vector<4x256xf32>
    %232 = arith.subf %200, %231 : vector<4x256xf32>
    %233 = math.exp %232 : vector<4x256xf32>
    %234 = arith.subf %230, %231 : vector<4x256xf32>
    %235 = math.exp %234 : vector<4x256xf32>
    %236 = arith.mulf %233, %206 : vector<4x256xf32>
    %237 = arith.addf %236, %235 : vector<4x256xf32>
    %cst_56 = arith.constant 0.000000e+00 : f32
    %238 = vector.shape_cast %224 : vector<1x256xi1> to vector<1x256xi1>
    %239 = vector.broadcast %238 : vector<1x256xi1> to vector<4x256xi1>
    %240 = vector.broadcast %cst_56 : f32 to vector<4x256xf32>
    %241 = arith.select %239, %235, %240 : vector<4x256xi1>, vector<4x256xf32>
    %242 = vector.shape_cast %233 : vector<4x256xf32> to vector<4x1x256xf32>
    %243 = vector.broadcast %242 : vector<4x1x256xf32> to vector<4x4x256xf32>
    %244 = arith.mulf %217, %243 : vector<4x4x256xf32>
    %245 = vector.shape_cast %241 : vector<4x256xf32> to vector<4x1x256xf32>
    %246 = vector.broadcast %245 : vector<4x1x256xf32> to vector<4x4x256xf32>
    %247 = arith.mulf %246, %219 : vector<4x4x256xf32>
    %248 = arith.addf %244, %247 : vector<4x4x256xf32>
    %249 = tpu.reciprocal %237 : vector<4x256xf32> -> vector<4x256xf32>
    %250 = vector.shape_cast %249 : vector<4x256xf32> to vector<4x1x256xf32>
    %251 = vector.broadcast %250 : vector<4x1x256xf32> to vector<4x4x256xf32>
    %252 = arith.mulf %248, %251 : vector<4x4x256xf32>
    %c0_57 = arith.constant 0 : index
    %c0_58 = arith.constant 0 : index
    %c0_59 = arith.constant 0 : index
    %253 = vector.load %arg5[%c0_57, %c0_58, %c0_59] : memref<4x4x256xf32, #tpu.memory_space<vmem>>, vector<4x4x256xf32>
    tpu.vector_store %arg5[%c0_57, %c0_58, %c0_59], %252 {strides = array<i32>} : memref<4x4x256xf32, #tpu.memory_space<vmem>>, vector<4x4x256xf32>,
    return
  }
  func.func @transform_0(%arg0: i32) -> (i32, i32) {
    %c0_i32 = arith.constant 0 : i32
    %c0_i32_0 = arith.constant 0 : i32
    %c0_i32_1 = arith.constant 0 : i32
    return %c0_i32, %c0_i32_0 : i32, i32
  }
  func.func @transform_1(%arg0: i32) -> (i32, i32, i32) {
    %c0_i32 = arith.constant 0 : i32
    %c0_i32_0 = arith.constant 0 : i32
    %c0_i32_1 = arith.constant 0 : i32
    return %arg0, %c0_i32, %c0_i32_0 : i32, i32, i32
  }
  func.func @transform_2(%arg0: i32) -> (i32, i32, i32) {
    %c0_i32 = arith.constant 0 : i32
    %c0_i32_0 = arith.constant 0 : i32
    %c0_i32_1 = arith.constant 0 : i32
    return %arg0, %c0_i32, %c0_i32_0 : i32, i32, i32
  }
  func.func @transform_3(%arg0: i32) -> (i32, i32, i32) {
    %c0_i32 = arith.constant 0 : i32
    %c0_i32_0 = arith.constant 0 : i32
    %c0_i32_1 = arith.constant 0 : i32
    return %arg0, %c0_i32, %c0_i32_0 : i32, i32, i32
  }
  func.func @transform_4(%arg0: i32) -> (i32, i32, i32) {
    %c0_i32 = arith.constant 0 : i32
    %c0_i32_0 = arith.constant 0 : i32
    %c0_i32_1 = arith.constant 0 : i32
    return %arg0, %c0_i32, %c0_i32_0 : i32, i32, i32
  }
}

</mosaic_0001>

<llo_original>
// kernel: tile.9
$region0: #{tile.9}
  %s0 = inlined_call_operand.vmem [shape: s32[16,16], index: 0, kind: input, shape index: {}]
  %s1 = inlined_call_operand.vmem [shape: s32[1,256], index: 1, kind: output, shape index: {}]
  $region1: #{tile.9} parent=0
    #allocation0 [shape = 'u8[8192]{0}', space=vmem, size = 0x2000, scoped, tag = 'scoped mem for output reshape']
    %s2 = smov 3
    %v3 = vld [vmem:[%s0] ss:$8 sm:%s2]
    %vm4 = vcmask 130048
    %5 = vst.msk [vmem:[#allocation0] ss:$8 sm:$0x3] %vm4, %v3
    %s6 = scalar_lea.vmem %s0, 7
    %s7 = smov 3
    %v8 = vld [vmem:[%s6] ss:$8 sm:%s7]
    %9 = vrot.lane.b32.xlu0 %v8, 112
    %v10 = vpop.permute.xlu0 %9
    %vm11 = vcmask 1048448
    %12 = vst.msk [vmem:[#allocation0] ss:$8 sm:$0x3] %vm11, %v10
    %s13 = scalar_lea.vmem %s0, 6
    %s14 = smov 3
    %v15 = vld [vmem:[%s13] ss:$8 sm:%s14]
    %16 = vrot.lane.b32.xlu0 %v15, 96
    %v17 = vpop.permute.xlu0 %16
    %vm18 = vcmask 917248
    %19 = vst.msk [vmem:[#allocation0] ss:$8 sm:$0x3] %vm18, %v17
    %s20 = scalar_lea.vmem %s0, 5
    %s21 = smov 3
    %v22 = vld [vmem:[%s20] ss:$8 sm:%s21]
    %23 = vrot.lane.b32.xlu0 %v22, 80
    %v24 = vpop.permute.xlu0 %23
    %vm25 = vcmask 786048
    %26 = vst.msk [vmem:[#allocation0] ss:$8 sm:$0x3] %vm25, %v24
    %s27 = scalar_lea.vmem %s0, 4
    %s28 = smov 3
    %v29 = vld [vmem:[%s27] ss:$8 sm:%s28]
    %30 = vrot.lane.b32.xlu0 %v29, 64
    %v31 = vpop.permute.xlu0 %30
    %vm32 = vcmask 654848
    %33 = vst.msk [vmem:[#allocation0] ss:$8 sm:$0x3] %vm32, %v31
    %s34 = scalar_lea.vmem %s0, 3
    %s35 = smov 3
    %v36 = vld [vmem:[%s34] ss:$8 sm:%s35]
    %37 = vrot.lane.b32.xlu0 %v36, 48
    %v38 = vpop.permute.xlu0 %37
    %vm39 = vcmask 523648
    %40 = vst.msk [vmem:[#allocation0] ss:$8 sm:$0x3] %vm39, %v38
    %s41 = scalar_lea.vmem %s0, 2
    %s42 = smov 3
    %v43 = vld [vmem:[%s41] ss:$8 sm:%s42]
    %44 = vrot.lane.b32.xlu0 %v43, 32
    %v45 = vpop.permute.xlu0 %44
    %vm46 = vcmask 392448
    %47 = vst.msk [vmem:[#allocation0] ss:$8 sm:$0x3] %vm46, %v45
    %s48 = scalar_lea.vmem %s0, 1
    %s49 = smov 3
    %v50 = vld [vmem:[%s48] ss:$8 sm:%s49]
    %51 = vrot.lane.b32.xlu0 %v50, 16
    %v52 = vpop.permute.xlu0 %51
    %vm53 = vcmask 261248
    %54 = vst.msk [vmem:[#allocation0] ss:$8 sm:$0x3] %vm53, %v52
    %s56 = sshllo.u32 0, 1
    %v58 = vld [vmem:[#allocation0] sm:%s56]
    %s59 = sshllo.u32 0, 1
    %60 = vst [vmem:[%s1] sm:%s59] %v58
    %s61 = scalar_lea.vmem [#allocation0], 8
    %v62 = vld [vmem:[%s61] sm:%s56]
    %s63 = sshllo.u32 0, 1
    %s64 = scalar_lea.vmem %s1, 1
    %65 = vst [vmem:[%s64] sm:%s63] %v62

// kernel: dilate_attention.1
$region0: #{dilate_attention.1}
  #allocation0 [shape = 'u32[]', space=smem, size = 0x4, offset = 0x4, fixed_abs, tag = 'smem constant byte address 0x4 - core index']
  #allocation1 [shape = 'u32[144,128]{1,0:T(1,128)}', space=vmem, size = 0x12000, scoped, tag = 'internal scratch']
  %s0 = inlined_call_operand.vmem [shape: s32[2,256], index: 0, kind: input, shape index: {}]
  %s1 = inlined_call_operand.vmem [shape: f32[8,4,256], index: 1, kind: input, shape index: {}]
  %s2 = inlined_call_operand.vmem [shape: f32[8,4,256], index: 2, kind: input, shape index: {}]
  %s3 = inlined_call_operand.vmem [shape: f32[8,4,256], index: 3, kind: input, shape index: {}]
  %s4 = inlined_call_operand.vmem [shape: f32[8,4,256], index: 4, kind: output, shape index: {}]
  %s5 = sld [smem:[#allocation0]]
  $region49: #{dilate_attention.1} parent=0
    _
  %s7 = ssub.s32 1, %s5
  %s8 = scalar_select 0, %s7, %s5
  loop: start=0, step=1, limit=4
  $region2: #{dilate_attention.1} parent=0 // loop_pre_header
    _
  $region3: #{dilate_attention.1} parent=0 // loop_header
    %s10 = sphi 0, %s14
    %p11 = scmp.ge.s32.totalorder %s10, 4
    %s18 = sphi 0, %s18
    %s20 = sphi 0, %s18
    %s21 = sphi 0, %s20
    %s35 = sphi 0, %s21
    %s41 = sphi 0, %s43
    %s44 = sphi 0, %s41
    %s45 = sphi 0, %s44
    %s61 = sphi 0, %s45
    %s67 = sphi 0, %s69
    %s70 = sphi 0, %s67
    %s71 = sphi 0, %s70
    %s87 = sphi 0, %s71
    %s93 = sphi 0, %s95
    %s96 = sphi 0, %s93
    %s97 = sphi 0, %s96
    %s113 = sphi 0, %s97
    %s119 = sphi 0, %s121
    %s122 = sphi 0, %s119
    %s123 = sphi 0, %s122
    %s139 = sphi 0, %s123
  $region4: #{dilate_attention.1} parent=0 // loop_header_branch
    %13 = sbr.rel (%p11) target = $region8
  $region5: #{dilate_attention.1} parent=0 // loop_body
    %s15 = ssub.s32 %s10, 1
    %s16 = ssub.s32 %s10, 2
    %s17 = sadd.s32 %s10, 1
    %s19 = sadd.s32 %s18, 1
    %p22 = scmp.eq.s32.totalorder %s10, 1
    %p23 = scmp.ne.s32.totalorder %s18, %s20
    %p24 = scmp.eq.s32.totalorder %s10, 0
    %p25 = por %p23, %p24
    %p26 = scmp.ne.s32.totalorder %s18, %s20
    %p27 = scmp.eq.s32.totalorder %s15, 1
    %p28 = por %p26, %p27
    %p29 = scmp.ne.s32.totalorder %s20, %s21
    %p30 = scmp.eq.s32.totalorder %s15, 0
    %p31 = por %p29, %p30
    %p32 = scmp.ne.s32.totalorder %s20, %s21
    %p33 = scmp.eq.s32.totalorder %s16, 1
    %p34 = por %p32, %p33
    %p36 = scmp.ne.s32.totalorder %s21, %s35
    %p37 = scmp.eq.s32.totalorder %s16, 0
    %p38 = por %p36, %p37
    %s39 = ssub.s32 %s10, %s17
    %p40 = scmp.eq.s32.totalorder %s39, 0
    %s42 = sadd.s32 %s41, 1
    %s43 = scalar_select %p40, %s41, %s42
    %p46 = pneg %p40
    %p47 = scmp.eq.s32.totalorder %s10, 1
    %p48 = por %p46, %p47
    %p49 = scmp.ne.s32.totalorder %s41, %s44
    %p50 = scmp.eq.s32.totalorder %s10, 0
    %p51 = por %p49, %p50
    %p52 = scmp.ne.s32.totalorder %s41, %s44
    %p53 = scmp.eq.s32.totalorder %s15, 1
    %p54 = por %p52, %p53
    %p55 = scmp.ne.s32.totalorder %s44, %s45
    %p56 = scmp.eq.s32.totalorder %s15, 0
    %p57 = por %p55, %p56
    %p58 = scmp.ne.s32.totalorder %s44, %s45
    %p59 = scmp.eq.s32.totalorder %s16, 1
    %p60 = por %p58, %p59
    %p62 = scmp.ne.s32.totalorder %s45, %s61
    %p63 = scmp.eq.s32.totalorder %s16, 0
    %p64 = por %p62, %p63
    %s65 = ssub.s32 %s10, %s17
    %p66 = scmp.eq.s32.totalorder %s65, 0
    %s68 = sadd.s32 %s67, 1
    %s69 = scalar_select %p66, %s67, %s68
    %p72 = pneg %p66
    %p73 = scmp.eq.s32.totalorder %s10, 1
    %p74 = por %p72, %p73
    %p75 = scmp.ne.s32.totalorder %s67, %s70
    %p76 = scmp.eq.s32.totalorder %s10, 0
    %p77 = por %p75, %p76
    %p78 = scmp.ne.s32.totalorder %s67, %s70
    %p79 = scmp.eq.s32.totalorder %s15, 1
    %p80 = por %p78, %p79
    %p81 = scmp.ne.s32.totalorder %s70, %s71
    %p82 = scmp.eq.s32.totalorder %s15, 0
    %p83 = por %p81, %p82
    %p84 = scmp.ne.s32.totalorder %s70, %s71
    %p85 = scmp.eq.s32.totalorder %s16, 1
    %p86 = por %p84, %p85
    %p88 = scmp.ne.s32.totalorder %s71, %s87
    %p89 = scmp.eq.s32.totalorder %s16, 0
    %p90 = por %p88, %p89
    %s91 = ssub.s32 %s10, %s17
    %p92 = scmp.eq.s32.totalorder %s91, 0
    %s94 = sadd.s32 %s93, 1
    %s95 = scalar_select %p92, %s93, %s94
    %p98 = pneg %p92
    %p99 = scmp.eq.s32.totalorder %s10, 1
    %p100 = por %p98, %p99
    %p101 = scmp.ne.s32.totalorder %s93, %s96
    %p102 = scmp.eq.s32.totalorder %s10, 0
    %p103 = por %p101, %p102
    %p104 = scmp.ne.s32.totalorder %s93, %s96
    %p105 = scmp.eq.s32.totalorder %s15, 1
    %p106 = por %p104, %p105
    %p107 = scmp.ne.s32.totalorder %s96, %s97
    %p108 = scmp.eq.s32.totalorder %s15, 0
    %p109 = por %p107, %p108
    %p110 = scmp.ne.s32.totalorder %s96, %s97
    %p111 = scmp.eq.s32.totalorder %s16, 1
    %p112 = por %p110, %p111
    %p114 = scmp.ne.s32.totalorder %s97, %s113
    %p115 = scmp.eq.s32.totalorder %s16, 0
    %p116 = por %p114, %p115
    %s117 = ssub.s32 %s10, %s17
    %p118 = scmp.eq.s32.totalorder %s117, 0
    %s120 = sadd.s32 %s119, 1
    %s121 = scalar_select %p118, %s119, %s120
    %p124 = pneg %p118
    %p125 = scmp.eq.s32.totalorder %s10, 1
    %p126 = por %p124, %p125
    %p127 = scmp.ne.s32.totalorder %s119, %s122
    %p128 = scmp.eq.s32.totalorder %s10, 0
    %p129 = por %p127, %p128
    %p130 = scmp.ne.s32.totalorder %s119, %s122
    %p131 = scmp.eq.s32.totalorder %s15, 1
    %p132 = por %p130, %p131
    %p133 = scmp.ne.s32.totalorder %s122, %s123
    %p134 = scmp.eq.s32.totalorder %s15, 0
    %p135 = por %p133, %p134
    %p136 = scmp.ne.s32.totalorder %s122, %s123
    %p137 = scmp.eq.s32.totalorder %s16, 1
    %p138 = por %p136, %p137
    %p140 = scmp.ne.s32.totalorder %s123, %s139
    %p141 = scmp.eq.s32.totalorder %s16, 0
    %p142 = por %p140, %p141
    %p143 = scmp.le.s32.totalorder 1, %s10
    %p144 = scmp.lt.s32.totalorder %s10, 3
    %p145 = pnand %p143, %p144
    %p146 = pneg %p145
    // Predicated region
    $region9: #{dilate_attention.1} parent=5 // pred_check
      _
    $region10: #{dilate_attention.1} parent=5 // pred_check_branch
      %148 = sbr.rel (%p145) target = $region12
    $region11: #{dilate_attention.1} parent=5 // pred_region
      %s149 = ssub.s32 %s10, 1
      // Predicated region
      $region13: #{dilate_attention.1} parent=11 // pred_check
        %p150 = pneg %p31
      $region14: #{dilate_attention.1} parent=11 // pred_check_branch
        %152 = sbr.rel (%p150) target = $region16
      $region15: #{dilate_attention.1} parent=11 // pred_region
        _
      $region16: #{dilate_attention.1} parent=11 // pred_fallthru
        _
    $region12: #{dilate_attention.1} parent=5 // pred_fallthru
      _
    %p153 = scmp.lt.s32.totalorder %s10, 2
    // Predicated region
    $region17: #{dilate_attention.1} parent=5 // pred_check
      %p154 = pneg %p153
    $region18: #{dilate_attention.1} parent=5 // pred_check_branch
      %156 = sbr.rel (%p154) target = $region20
    $region19: #{dilate_attention.1} parent=5 // pred_region
      // Predicated region
      $region21: #{dilate_attention.1} parent=19 // pred_check
        %p157 = pneg %p51
      $region22: #{dilate_attention.1} parent=19 // pred_check_branch
        %159 = sbr.rel (%p157) target = $region24
      $region23: #{dilate_attention.1} parent=19 // pred_region
        %s160 = smul.u32 4, %s10
        %p161 = scmp.lt.s32.totalorder %s160, 7
        %s162 = scalar_select %p161, %s160, 7
        %s163 = smul.addr %s162, 2
        %s164 = smul.addr %s163, 4
        %s165 = scalar_lea.vmem %s1, %s164
        %s166 = smul.u32 4, %s10
      $region24: #{dilate_attention.1} parent=19 // pred_fallthru
        _
      // Predicated region
      $region25: #{dilate_attention.1} parent=19 // pred_check
        %p167 = pneg %p77
      $region26: #{dilate_attention.1} parent=19 // pred_check_branch
        %169 = sbr.rel (%p167) target = $region28
      $region27: #{dilate_attention.1} parent=19 // pred_region
        %s170 = smul.u32 4, %s10
        %p171 = scmp.lt.s32.totalorder %s170, 7
        %s172 = scalar_select %p171, %s170, 7
        %s173 = smul.addr %s172, 2
        %s174 = smul.addr %s173, 4
        %s175 = scalar_lea.vmem %s2, %s174
        %s176 = smul.u32 4, %s10
      $region28: #{dilate_attention.1} parent=19 // pred_fallthru
        _
      // Predicated region
      $region29: #{dilate_attention.1} parent=19 // pred_check
        %p177 = pneg %p103
      $region30: #{dilate_attention.1} parent=19 // pred_check_branch
        %179 = sbr.rel (%p177) target = $region32
      $region31: #{dilate_attention.1} parent=19 // pred_region
        %s180 = smul.u32 4, %s10
        %p181 = scmp.lt.s32.totalorder %s180, 7
        %s182 = scalar_select %p181, %s180, 7
        %s183 = smul.addr %s182, 2
        %s184 = smul.addr %s183, 4
        %s185 = scalar_lea.vmem %s3, %s184
        %s186 = smul.u32 4, %s10
      $region32: #{dilate_attention.1} parent=19 // pred_fallthru
        _
    $region20: #{dilate_attention.1} parent=5 // pred_fallthru
      _
    %p187 = scmp.le.s32.totalorder 1, %s10
    %p188 = scmp.lt.s32.totalorder %s10, 3
    %p189 = pnand %p187, %p188
    %p190 = pneg %p189
    // Predicated region
    $region33: #{dilate_attention.1} parent=5 // pred_check
      _
    $region34: #{dilate_attention.1} parent=5 // pred_check_branch
      %192 = sbr.rel (%p189) target = $region36
    $region35: #{dilate_attention.1} parent=5 // pred_region
      %s193 = ssub.s32 %s10, 1
      %p194 = pneg %p31
      %p195 = pneg %p28
      %s196 = smul.u32 4, %s15
      %p197 = scmp.lt.s32.totalorder %s196, 7
      %s198 = scalar_select %p197, %s196, 7
      %s199 = smul.addr %s198, 2
      %s200 = smul.addr %s199, 4
      %s201 = scalar_lea.vmem %s1, %s200
      %p202 = pneg %p57
      %p203 = pneg %p54
      %s204 = smul.u32 4, %s15
      %p205 = scmp.lt.s32.totalorder %s204, 7
      %s206 = scalar_select %p205, %s204, 7
      %s207 = smul.addr %s206, 2
      %s208 = smul.addr %s207, 4
      %s209 = scalar_lea.vmem %s2, %s208
      %p210 = pneg %p83
      %p211 = pneg %p80
      %s212 = smul.u32 4, %s15
      %p213 = scmp.lt.s32.totalorder %s212, 7
      %s214 = scalar_select %p213, %s212, 7
      %s215 = smul.addr %s214, 2
      %s216 = smul.addr %s215, 4
      %s217 = scalar_lea.vmem %s3, %s216
      %p218 = pneg %p109
      %p219 = pneg %p106
      %p220 = pneg %p135
      %p221 = pneg %p132
      %s222 = smul.u32 4, %s15
      %p223 = scmp.lt.s32.totalorder %s222, 7
      %s224 = scalar_select %p223, %s222, 7
      %s225 = smul.addr %s224, 2
      %s226 = smul.addr %s225, 4
      %s227 = scalar_lea.vmem %s4, %s226
      %s228 = smul.u32 4, %s15
      %p229 = scmp.lt.s32.totalorder %s228, 7
      %s230 = scalar_select %p229, %s228, 7
      %s231 = smul.addr %s230, 2
      %s232 = smul.addr %s231, 4
      %s233 = scalar_lea.vmem %s1, %s232
      %s234 = smul.u32 4, %s15
      %s235 = smul.u32 4, %s15
      %p236 = scmp.lt.s32.totalorder %s235, 7
      %s237 = scalar_select %p236, %s235, 7
      %s238 = smul.addr %s237, 2
      %s239 = smul.addr %s238, 4
      %s240 = scalar_lea.vmem %s2, %s239
      %s241 = smul.u32 4, %s15
      %s242 = smul.u32 4, %s15
      %p243 = scmp.lt.s32.totalorder %s242, 7
      %s244 = scalar_select %p243, %s242, 7
      %s245 = smul.addr %s244, 2
      %s246 = smul.addr %s245, 4
      %s247 = scalar_lea.vmem %s3, %s246
      %s248 = smul.u32 4, %s15
      %s249 = smul.u32 4, %s15
      %p250 = scmp.lt.s32.totalorder %s249, 7
      %s251 = scalar_select %p250, %s249, 7
      %s252 = smul.addr %s251, 2
      %s253 = smul.addr %s252, 4
      %s254 = scalar_lea.vmem %s4, %s253
      %s255 = smul.u32 4, %s15
      %v256 = vld [vmem:[%s0] ss:$2 sm:$0x3]
      %s257 = scalar_lea.vmem %s0, 1
      %v258 = vld [vmem:[%s257] ss:$2 sm:$0x3]
      %v259 = vld [vmem:[%s233] sm:$0xff]
      %v260 = vld [vmem:[%s233 + $0x8] sm:$0xff]
      %v261 = vld [vmem:[%s233 + $0x10] sm:$0xff]
      %v262 = vld [vmem:[%s233 + $0x18] sm:$0xff]
      %v263 = vmul.f32 %v259, 0.5
      %v264 = vmul.f32 %v260, 0.5
      %v265 = vmul.f32 %v261, 0.5
      %v266 = vmul.f32 %v262, 0.5
      %v267 = vld [vmem:[%s240] sm:$0xff]
      %v268 = vld [vmem:[%s240 + $0x8] sm:$0xff]
      %v269 = vld [vmem:[%s240 + $0x10] sm:$0xff]
      %v270 = vld [vmem:[%s240 + $0x18] sm:$0xff]
      %v271 = vld [vmem:[%s247] sm:$0xff]
      %v272 = vld [vmem:[%s247 + $0x8] sm:$0xff]
      %v273 = vld [vmem:[%s247 + $0x10] sm:$0xff]
      %v274 = vld [vmem:[%s247 + $0x18] sm:$0xff]
      %v279 = vcombine.high %v267, %v267
      %v280 = vcombine.high %v268, %v268
      %v281 = vcombine.high %v269, %v269
      %v282 = vcombine.high %v270, %v270
      %287 = vrot.lane.b32.xlu0 %v267, 17
      %v288 = vpop.permute.xlu0 %287
      %289 = vrot.lane.b32.xlu0 %v268, 17
      %v290 = vpop.permute.xlu0 %289
      %291 = vrot.lane.b32.xlu0 %v269, 17
      %v292 = vpop.permute.xlu0 %291
      %293 = vrot.lane.b32.xlu0 %v270, 17
      %v294 = vpop.permute.xlu0 %293
      %295 = vrot.lane.b32.xlu0 %v279, 17
      %v296 = vpop.permute.xlu0 %295
      %297 = vrot.lane.b32.xlu0 %v280, 17
      %v298 = vpop.permute.xlu0 %297
      %299 = vrot.lane.b32.xlu0 %v281, 17
      %v300 = vpop.permute.xlu0 %299
      %301 = vrot.lane.b32.xlu0 %v282, 17
      %v302 = vpop.permute.xlu0 %301
      %v303 = vlaneseq
      %v304 = vand.u32 %v303, 127
      %vm305 = vcmp.lt.s32.totalorder %v304, 17
      %v306 = vsel %vm305, %v288, %v296
      %v307 = vsel %vm305, %v290, %v298
      %v308 = vsel %vm305, %v292, %v300
      %v309 = vsel %vm305, %v294, %v302
      %v310 = vsel %vm305, %v296, %v288
      %v311 = vsel %vm305, %v298, %v290
      %v312 = vsel %vm305, %v300, %v292
      %v313 = vsel %vm305, %v302, %v294
      %v318 = vcombine.high %v271, %v271
      %v319 = vcombine.high %v272, %v272
      %v320 = vcombine.high %v273, %v273
      %v321 = vcombine.high %v274, %v274
      %326 = vrot.lane.b32.xlu0 %v271, 17
      %v327 = vpop.permute.xlu0 %326
      %328 = vrot.lane.b32.xlu0 %v272, 17
      %v329 = vpop.permute.xlu0 %328
      %330 = vrot.lane.b32.xlu0 %v273, 17
      %v331 = vpop.permute.xlu0 %330
      %332 = vrot.lane.b32.xlu0 %v274, 17
      %v333 = vpop.permute.xlu0 %332
      %334 = vrot.lane.b32.xlu0 %v318, 17
      %v335 = vpop.permute.xlu0 %334
      %336 = vrot.lane.b32.xlu0 %v319, 17
      %v337 = vpop.permute.xlu0 %336
      %338 = vrot.lane.b32.xlu0 %v320, 17
      %v339 = vpop.permute.xlu0 %338
      %340 = vrot.lane.b32.xlu0 %v321, 17
      %v341 = vpop.permute.xlu0 %340
      %v342 = vsel %vm305, %v327, %v335
      %v343 = vsel %vm305, %v329, %v337
      %v344 = vsel %vm305, %v331, %v339
      %v345 = vsel %vm305, %v333, %v341
      %v346 = vsel %vm305, %v335, %v327
      %v347 = vsel %vm305, %v337, %v329
      %v348 = vsel %vm305, %v339, %v331
      %v349 = vsel %vm305, %v341, %v333
      %vm350 = vcmp.ge.s32.totalorder %v256, 1
      %vm351 = vcmp.ge.s32.totalorder %v258, 1
      %vm352 = vmand %vm350, %vm351
      %v361 = vcombine.low %v310, %v306
      %v362 = vcombine.low %v311, %v307
      %v363 = vcombine.low %v312, %v308
      %v364 = vcombine.low %v313, %v309
      %v369 = vmul.f32 %v263, %v361
      %v370 = vmul.f32 %v264, %v362
      %v371 = vmul.f32 %v265, %v363
      %v372 = vmul.f32 %v266, %v364
      %v377 = vcombine.high %v369, %v369
      %v378 = vcombine.high %v370, %v370
      %v379 = vcombine.high %v371, %v371
      %v380 = vcombine.high %v372, %v372
      %vm385 = vcmask 1043456
      %v386 = vsel %vm385, %v369, 0.0
      %v387 = vrot.slane %v386, 4
      %v388 = vadd.f32 %v386, %v387
      %v389 = vrot.slane %v388, 2
      %v390 = vadd.f32 %v388, %v389
      %v391 = vrot.slane %v390, 1
      %v392 = vadd.f32 %v390, %v391
      %v393 = vsel %vm385, %v377, 0.0
      %v394 = vrot.slane %v393, 4
      %v395 = vadd.f32 %v393, %v394
      %v396 = vrot.slane %v395, 2
      %v397 = vadd.f32 %v395, %v396
      %v398 = vrot.slane %v397, 1
      %v399 = vadd.f32 %v397, %v398
      %v400 = vsel %vm385, %v370, 0.0
      %v401 = vrot.slane %v400, 4
      %v402 = vadd.f32 %v400, %v401
      %v403 = vrot.slane %v402, 2
      %v404 = vadd.f32 %v402, %v403
      %v405 = vrot.slane %v404, 1
      %v406 = vadd.f32 %v404, %v405
      %v407 = vsel %vm385, %v378, 0.0
      %v408 = vrot.slane %v407, 4
      %v409 = vadd.f32 %v407, %v408
      %v410 = vrot.slane %v409, 2
      %v411 = vadd.f32 %v409, %v410
      %v412 = vrot.slane %v411, 1
      %v413 = vadd.f32 %v411, %v412
      %v414 = vsel %vm385, %v371, 0.0
      %v415 = vrot.slane %v414, 4
      %v416 = vadd.f32 %v414, %v415
      %v417 = vrot.slane %v416, 2
      %v418 = vadd.f32 %v416, %v417
      %v419 = vrot.slane %v418, 1
      %v420 = vadd.f32 %v418, %v419
      %v421 = vsel %vm385, %v379, 0.0
      %v422 = vrot.slane %v421, 4
      %v423 = vadd.f32 %v421, %v422
      %v424 = vrot.slane %v423, 2
      %v425 = vadd.f32 %v423, %v424
      %v426 = vrot.slane %v425, 1
      %v427 = vadd.f32 %v425, %v426
      %v428 = vsel %vm385, %v372, 0.0
      %v429 = vrot.slane %v428, 4
      %v430 = vadd.f32 %v428, %v429
      %v431 = vrot.slane %v430, 2
      %v432 = vadd.f32 %v430, %v431
      %v433 = vrot.slane %v432, 1
      %v434 = vadd.f32 %v432, %v433
      %v435 = vsel %vm385, %v380, 0.0
      %v436 = vrot.slane %v435, 4
      %v437 = vadd.f32 %v435, %v436
      %v438 = vrot.slane %v437, 2
      %v439 = vadd.f32 %v437, %v438
      %v440 = vrot.slane %v439, 1
      %v441 = vadd.f32 %v439, %v440
      %v442 = vsel %vm352, 1, 0
      %v443 = vlaneseq
      %v444 = vshrl.u32 %v443, 7
      %v445 = vsub.s32 0, %v444
      %v446 = vrot.slane %v442, %v445
      %v447 = vlaneseq
      %v448 = vshrl.u32 %v447, 7
      %v449 = vsub.s32 1, %v448
      %v450 = vrot.slane %v442, %v449
      %vm451 = vcmp.eq.s32.totalorder %v446, 1
      %vm452 = vcmp.eq.s32.totalorder %v450, 1
      %vm461 = vcmask 1041409
      %v462 = vsel %vm461, %v406, %v392
      %vm463 = vcmask 1042434
      %v464 = vsel %vm463, %v420, %v462
      %vm465 = vcmask 1043459
      %v466 = vsel %vm465, %v434, %v464
      %v467 = vsel %vm461, %v413, %v399
      %v468 = vsel %vm463, %v427, %v467
      %v469 = vsel %vm465, %v441, %v468
      %v472 = vsel %vm451, %v466, 0.0
      %v473 = vsel %vm452, %v469, 0.0
      %v474 = vsel %vm451, 1.0, 0.0
      %v475 = vsel %vm452, 1.0, 0.0
      %v478 = vcombine.low %v474, %v475
      %v480 = vunpack.c.l.s4 1966171168
      %v481 = vunpack.c.0.s8 %v480
      %v482 = vlaneseq
      %v483 = vshrl.u32 %v482, 7
      %v484 = vsub.s32 %v481, %v483
      %v485 = vrot.slane %v478, %v484
      %v486 = vcombine.high %v485, %v485
      %v488 = vunpack.c.l.s4 1966171168
      %v489 = vunpack.c.0.s8 %v488
      %v490 = vlaneseq
      %v491 = vshrl.u32 %v490, 7
      %v492 = vsub.s32 %v489, %v491
      %v493 = vrot.slane %v485, %v492
      %v495 = vunpack.c.l.s4 1966171168
      %v496 = vunpack.c.0.s8 %v495
      %v497 = vlaneseq
      %v498 = vshrl.u32 %v497, 7
      %v499 = vsub.s32 %v496, %v498
      %v500 = vrot.slane %v486, %v499
      %v501 = vcombine.high %v493, %v493
      %v502 = vcombine.high %v500, %v500
      %v503 = vlaneseq
      %v504 = vshrl.u32 %v503, 7
      %v505 = vsub.s32 0, %v504
      %v506 = vrot.slane %v493, %v505
      %v507 = vlaneseq
      %v508 = vshrl.u32 %v507, 7
      %v509 = vsub.s32 1, %v508
      %v510 = vrot.slane %v493, %v509
      %v511 = vlaneseq
      %v512 = vshrl.u32 %v511, 7
      %v513 = vsub.s32 0, %v512
      %v514 = vrot.slane %v500, %v513
      %v515 = vlaneseq
      %v516 = vshrl.u32 %v515, 7
      %v517 = vsub.s32 1, %v516
      %v518 = vrot.slane %v500, %v517
      %v519 = vlaneseq
      %v520 = vshrl.u32 %v519, 7
      %v521 = vsub.s32 0, %v520
      %v522 = vrot.slane %v501, %v521
      %v523 = vlaneseq
      %v524 = vshrl.u32 %v523, 7
      %v525 = vsub.s32 1, %v524
      %v526 = vrot.slane %v501, %v525
      %v527 = vlaneseq
      %v528 = vshrl.u32 %v527, 7
      %v529 = vsub.s32 0, %v528
      %v530 = vrot.slane %v502, %v529
      %v531 = vlaneseq
      %v532 = vshrl.u32 %v531, 7
      %v533 = vsub.s32 1, %v532
      %v534 = vrot.slane %v502, %v533
      %v543 = vmul.f32 %v506, %v346
      %v544 = vmul.f32 %v510, %v342
      %v545 = vmul.f32 %v514, %v347
      %v546 = vmul.f32 %v518, %v343
      %v547 = vmul.f32 %v522, %v348
      %v548 = vmul.f32 %v526, %v344
      %v549 = vmul.f32 %v530, %v349
      %v550 = vmul.f32 %v534, %v345
      %551 = vrot.lane.b32.xlu0 %v267, 16
      %v552 = vpop.permute.xlu0 %551
      %553 = vrot.lane.b32.xlu0 %v268, 16
      %v554 = vpop.permute.xlu0 %553
      %555 = vrot.lane.b32.xlu0 %v269, 16
      %v556 = vpop.permute.xlu0 %555
      %557 = vrot.lane.b32.xlu0 %v270, 16
      %v558 = vpop.permute.xlu0 %557
      %559 = vrot.lane.b32.xlu0 %v279, 16
      %v560 = vpop.permute.xlu0 %559
      %561 = vrot.lane.b32.xlu0 %v280, 16
      %v562 = vpop.permute.xlu0 %561
      %563 = vrot.lane.b32.xlu0 %v281, 16
      %v564 = vpop.permute.xlu0 %563
      %565 = vrot.lane.b32.xlu0 %v282, 16
      %v566 = vpop.permute.xlu0 %565
      %vm567 = vcmp.lt.s32.totalorder %v304, 16
      %v568 = vsel %vm567, %v552, %v560
      %v569 = vsel %vm567, %v554, %v562
      %v570 = vsel %vm567, %v556, %v564
      %v571 = vsel %vm567, %v558, %v566
      %v572 = vsel %vm567, %v560, %v552
      %v573 = vsel %vm567, %v562, %v554
      %v574 = vsel %vm567, %v564, %v556
      %v575 = vsel %vm567, %v566, %v558
      %576 = vrot.lane.b32.xlu0 %v271, 16
      %v577 = vpop.permute.xlu0 %576
      %578 = vrot.lane.b32.xlu0 %v272, 16
      %v579 = vpop.permute.xlu0 %578
      %580 = vrot.lane.b32.xlu0 %v273, 16
      %v581 = vpop.permute.xlu0 %580
      %582 = vrot.lane.b32.xlu0 %v274, 16
      %v583 = vpop.permute.xlu0 %582
      %584 = vrot.lane.b32.xlu0 %v318, 16
      %v585 = vpop.permute.xlu0 %584
      %586 = vrot.lane.b32.xlu0 %v319, 16
      %v587 = vpop.permute.xlu0 %586
      %588 = vrot.lane.b32.xlu0 %v320, 16
      %v589 = vpop.permute.xlu0 %588
      %590 = vrot.lane.b32.xlu0 %v321, 16
      %v591 = vpop.permute.xlu0 %590
      %v592 = vsel %vm567, %v577, %v585
      %v593 = vsel %vm567, %v579, %v587
      %v594 = vsel %vm567, %v581, %v589
      %v595 = vsel %vm567, %v583, %v591
      %v596 = vsel %vm567, %v585, %v577
      %v597 = vsel %vm567, %v587, %v579
      %v598 = vsel %vm567, %v589, %v581
      %v599 = vsel %vm567, %v591, %v583
      %v608 = vcombine.low %v572, %v568
      %v609 = vcombine.low %v573, %v569
      %v610 = vcombine.low %v574, %v570
      %v611 = vcombine.low %v575, %v571
      %v616 = vmul.f32 %v263, %v608
      %v617 = vmul.f32 %v264, %v609
      %v618 = vmul.f32 %v265, %v610
      %v619 = vmul.f32 %v266, %v611
      %v624 = vcombine.high %v616, %v616
      %v625 = vcombine.high %v617, %v617
      %v626 = vcombine.high %v618, %v618
      %v627 = vcombine.high %v619, %v619
      %v632 = vsel %vm385, %v616, 0.0
      %v633 = vrot.slane %v632, 4
      %v634 = vadd.f32 %v632, %v633
      %v635 = vrot.slane %v634, 2
      %v636 = vadd.f32 %v634, %v635
      %v637 = vrot.slane %v636, 1
      %v638 = vadd.f32 %v636, %v637
      %v639 = vsel %vm385, %v624, 0.0
      %v640 = vrot.slane %v639, 4
      %v641 = vadd.f32 %v639, %v640
      %v642 = vrot.slane %v641, 2
      %v643 = vadd.f32 %v641, %v642
      %v644 = vrot.slane %v643, 1
      %v645 = vadd.f32 %v643, %v644
      %v646 = vsel %vm385, %v617, 0.0
      %v647 = vrot.slane %v646, 4
      %v648 = vadd.f32 %v646, %v647
      %v649 = vrot.slane %v648, 2
      %v650 = vadd.f32 %v648, %v649
      %v651 = vrot.slane %v650, 1
      %v652 = vadd.f32 %v650, %v651
      %v653 = vsel %vm385, %v625, 0.0
      %v654 = vrot.slane %v653, 4
      %v655 = vadd.f32 %v653, %v654
      %v656 = vrot.slane %v655, 2
      %v657 = vadd.f32 %v655, %v656
      %v658 = vrot.slane %v657, 1
      %v659 = vadd.f32 %v657, %v658
      %v660 = vsel %vm385, %v618, 0.0
      %v661 = vrot.slane %v660, 4
      %v662 = vadd.f32 %v660, %v661
      %v663 = vrot.slane %v662, 2
      %v664 = vadd.f32 %v662, %v663
      %v665 = vrot.slane %v664, 1
      %v666 = vadd.f32 %v664, %v665
      %v667 = vsel %vm385, %v626, 0.0
      %v668 = vrot.slane %v667, 4
      %v669 = vadd.f32 %v667, %v668
      %v670 = vrot.slane %v669, 2
      %v671 = vadd.f32 %v669, %v670
      %v672 = vrot.slane %v671, 1
      %v673 = vadd.f32 %v671, %v672
      %v674 = vsel %vm385, %v619, 0.0
      %v675 = vrot.slane %v674, 4
      %v676 = vadd.f32 %v674, %v675
      %v677 = vrot.slane %v676, 2
      %v678 = vadd.f32 %v676, %v677
      %v679 = vrot.slane %v678, 1
      %v680 = vadd.f32 %v678, %v679
      %v681 = vsel %vm385, %v627, 0.0
      %v682 = vrot.slane %v681, 4
      %v683 = vadd.f32 %v681, %v682
      %v684 = vrot.slane %v683, 2
      %v685 = vadd.f32 %v683, %v684
      %v686 = vrot.slane %v685, 1
      %v687 = vadd.f32 %v685, %v686
      %v688 = vsel %vm350, 1, 0
      %v689 = vlaneseq
      %v690 = vshrl.u32 %v689, 7
      %v691 = vsub.s32 0, %v690
      %v692 = vrot.slane %v688, %v691
      %v693 = vlaneseq
      %v694 = vshrl.u32 %v693, 7
      %v695 = vsub.s32 1, %v694
      %v696 = vrot.slane %v688, %v695
      %vm697 = vcmp.eq.s32.totalorder %v692, 1
      %vm698 = vcmp.eq.s32.totalorder %v696, 1
      %v707 = vsel %vm461, %v652, %v638
      %v708 = vsel %vm463, %v666, %v707
      %v709 = vsel %vm465, %v680, %v708
      %v710 = vsel %vm461, %v659, %v645
      %v711 = vsel %vm463, %v673, %v710
      %v712 = vsel %vm465, %v687, %v711
      %v715 = vsel %vm697, %v709, 0.0
      %v716 = vsel %vm698, %v712, 0.0
      %v717 = vmax.f32 %v472, %v715
      %v718 = vmax.f32 %v473, %v716
      %v719 = vsub.f32 %v472, %v717
      %v720 = vsub.f32 %v473, %v718
      %v721 = vmul.f32 %v719, 1.442695
      %v722 = vpow.pop %v721
      %v723 = vmul.f32 %v720, 1.442695
      %v724 = vpow.pop %v723
      %v725 = vsub.f32 %v715, %v717
      %v726 = vsub.f32 %v716, %v718
      %v727 = vmul.f32 %v725, 1.442695
      %v728 = vpow.pop %v727
      %v729 = vmul.f32 %v726, 1.442695
      %v730 = vpow.pop %v729
      %v731 = vadd.f32 %v722, %v728
      %v732 = vadd.f32 %v724, %v730
      %v733 = vsel %vm697, %v728, 0.0
      %v734 = vsel %vm698, %v730, 0.0
      %v737 = vcombine.low %v722, %v724
      %v739 = vunpack.c.l.s4 1966171168
      %v740 = vunpack.c.0.s8 %v739
      %v741 = vlaneseq
      %v742 = vshrl.u32 %v741, 7
      %v743 = vsub.s32 %v740, %v742
      %v744 = vrot.slane %v737, %v743
      %v745 = vcombine.high %v744, %v744
      %v747 = vunpack.c.l.s4 1966171168
      %v748 = vunpack.c.0.s8 %v747
      %v749 = vlaneseq
      %v750 = vshrl.u32 %v749, 7
      %v751 = vsub.s32 %v748, %v750
      %v752 = vrot.slane %v744, %v751
      %v754 = vunpack.c.l.s4 1966171168
      %v755 = vunpack.c.0.s8 %v754
      %v756 = vlaneseq
      %v757 = vshrl.u32 %v756, 7
      %v758 = vsub.s32 %v755, %v757
      %v759 = vrot.slane %v745, %v758
      %v760 = vcombine.high %v752, %v752
      %v761 = vcombine.high %v759, %v759
      %v762 = vlaneseq
      %v763 = vshrl.u32 %v762, 7
      %v764 = vsub.s32 0, %v763
      %v765 = vrot.slane %v752, %v764
      %v766 = vlaneseq
      %v767 = vshrl.u32 %v766, 7
      %v768 = vsub.s32 1, %v767
      %v769 = vrot.slane %v752, %v768
      %v770 = vlaneseq
      %v771 = vshrl.u32 %v770, 7
      %v772 = vsub.s32 0, %v771
      %v773 = vrot.slane %v759, %v772
      %v774 = vlaneseq
      %v775 = vshrl.u32 %v774, 7
      %v776 = vsub.s32 1, %v775
      %v777 = vrot.slane %v759, %v776
      %v778 = vlaneseq
      %v779 = vshrl.u32 %v778, 7
      %v780 = vsub.s32 0, %v779
      %v781 = vrot.slane %v760, %v780
      %v782 = vlaneseq
      %v783 = vshrl.u32 %v782, 7
      %v784 = vsub.s32 1, %v783
      %v785 = vrot.slane %v760, %v784
      %v786 = vlaneseq
      %v787 = vshrl.u32 %v786, 7
      %v788 = vsub.s32 0, %v787
      %v789 = vrot.slane %v761, %v788
      %v790 = vlaneseq
      %v791 = vshrl.u32 %v790, 7
      %v792 = vsub.s32 1, %v791
      %v793 = vrot.slane %v761, %v792
      %v802 = vmul.f32 %v543, %v765
      %v803 = vmul.f32 %v544, %v769
      %v804 = vmul.f32 %v545, %v773
      %v805 = vmul.f32 %v546, %v777
      %v806 = vmul.f32 %v547, %v781
      %v807 = vmul.f32 %v548, %v785
      %v808 = vmul.f32 %v549, %v789
      %v809 = vmul.f32 %v550, %v793
      %v812 = vcombine.low %v733, %v734
      %v814 = vunpack.c.l.s4 1966171168
      %v815 = vunpack.c.0.s8 %v814
      %v816 = vlaneseq
      %v817 = vshrl.u32 %v816, 7
      %v818 = vsub.s32 %v815, %v817
      %v819 = vrot.slane %v812, %v818
      %v820 = vcombine.high %v819, %v819
      %v822 = vunpack.c.l.s4 1966171168
      %v823 = vunpack.c.0.s8 %v822
      %v824 = vlaneseq
      %v825 = vshrl.u32 %v824, 7
      %v826 = vsub.s32 %v823, %v825
      %v827 = vrot.slane %v819, %v826
      %v829 = vunpack.c.l.s4 1966171168
      %v830 = vunpack.c.0.s8 %v829
      %v831 = vlaneseq
      %v832 = vshrl.u32 %v831, 7
      %v833 = vsub.s32 %v830, %v832
      %v834 = vrot.slane %v820, %v833
      %v835 = vcombine.high %v827, %v827
      %v836 = vcombine.high %v834, %v834
      %v837 = vlaneseq
      %v838 = vshrl.u32 %v837, 7
      %v839 = vsub.s32 0, %v838
      %v840 = vrot.slane %v827, %v839
      %v841 = vlaneseq
      %v842 = vshrl.u32 %v841, 7
      %v843 = vsub.s32 1, %v842
      %v844 = vrot.slane %v827, %v843
      %v845 = vlaneseq
      %v846 = vshrl.u32 %v845, 7
      %v847 = vsub.s32 0, %v846
      %v848 = vrot.slane %v834, %v847
      %v849 = vlaneseq
      %v850 = vshrl.u32 %v849, 7
      %v851 = vsub.s32 1, %v850
      %v852 = vrot.slane %v834, %v851
      %v853 = vlaneseq
      %v854 = vshrl.u32 %v853, 7
      %v855 = vsub.s32 0, %v854
      %v856 = vrot.slane %v835, %v855
      %v857 = vlaneseq
      %v858 = vshrl.u32 %v857, 7
      %v859 = vsub.s32 1, %v858
      %v860 = vrot.slane %v835, %v859
      %v861 = vlaneseq
      %v862 = vshrl.u32 %v861, 7
      %v863 = vsub.s32 0, %v862
      %v864 = vrot.slane %v836, %v863
      %v865 = vlaneseq
      %v866 = vshrl.u32 %v865, 7
      %v867 = vsub.s32 1, %v866
      %v868 = vrot.slane %v836, %v867
      %v877 = vmul.f32 %v840, %v596
      %v878 = vmul.f32 %v844, %v592
      %v879 = vmul.f32 %v848, %v597
      %v880 = vmul.f32 %v852, %v593
      %v881 = vmul.f32 %v856, %v598
      %v882 = vmul.f32 %v860, %v594
      %v883 = vmul.f32 %v864, %v599
      %v884 = vmul.f32 %v868, %v595
      %v885 = vadd.f32 %v802, %v877
      %v886 = vadd.f32 %v803, %v878
      %v887 = vadd.f32 %v804, %v879
      %v888 = vadd.f32 %v805, %v880
      %v889 = vadd.f32 %v806, %v881
      %v890 = vadd.f32 %v807, %v882
      %v891 = vadd.f32 %v808, %v883
      %v892 = vadd.f32 %v809, %v884
      %893 = vrot.lane.b32.xlu0 %v267, 15
      %v894 = vpop.permute.xlu0 %893
      %895 = vrot.lane.b32.xlu0 %v268, 15
      %v896 = vpop.permute.xlu0 %895
      %897 = vrot.lane.b32.xlu0 %v269, 15
      %v898 = vpop.permute.xlu0 %897
      %899 = vrot.lane.b32.xlu0 %v270, 15
      %v900 = vpop.permute.xlu0 %899
      %901 = vrot.lane.b32.xlu0 %v279, 15
      %v902 = vpop.permute.xlu0 %901
      %903 = vrot.lane.b32.xlu0 %v280, 15
      %v904 = vpop.permute.xlu0 %903
      %905 = vrot.lane.b32.xlu0 %v281, 15
      %v906 = vpop.permute.xlu0 %905
      %907 = vrot.lane.b32.xlu0 %v282, 15
      %v908 = vpop.permute.xlu0 %907
      %vm909 = vcmp.lt.s32.totalorder %v304, 15
      %v910 = vsel %vm909, %v894, %v902
      %v911 = vsel %vm909, %v896, %v904
      %v912 = vsel %vm909, %v898, %v906
      %v913 = vsel %vm909, %v900, %v908
      %v914 = vsel %vm909, %v902, %v894
      %v915 = vsel %vm909, %v904, %v896
      %v916 = vsel %vm909, %v906, %v898
      %v917 = vsel %vm909, %v908, %v900
      %918 = vrot.lane.b32.xlu0 %v271, 15
      %v919 = vpop.permute.xlu0 %918
      %920 = vrot.lane.b32.xlu0 %v272, 15
      %v921 = vpop.permute.xlu0 %920
      %922 = vrot.lane.b32.xlu0 %v273, 15
      %v923 = vpop.permute.xlu0 %922
      %924 = vrot.lane.b32.xlu0 %v274, 15
      %v925 = vpop.permute.xlu0 %924
      %926 = vrot.lane.b32.xlu0 %v318, 15
      %v927 = vpop.permute.xlu0 %926
      %928 = vrot.lane.b32.xlu0 %v319, 15
      %v929 = vpop.permute.xlu0 %928
      %930 = vrot.lane.b32.xlu0 %v320, 15
      %v931 = vpop.permute.xlu0 %930
      %932 = vrot.lane.b32.xlu0 %v321, 15
      %v933 = vpop.permute.xlu0 %932
      %v934 = vsel %vm909, %v919, %v927
      %v935 = vsel %vm909, %v921, %v929
      %v936 = vsel %vm909, %v923, %v931
      %v937 = vsel %vm909, %v925, %v933
      %v938 = vsel %vm909, %v927, %v919
      %v939 = vsel %vm909, %v929, %v921
      %v940 = vsel %vm909, %v931, %v923
      %v941 = vsel %vm909, %v933, %v925
      %vm942 = vcmp.lt.s32.totalorder %v258, 15
      %vm943 = vmand %vm350, %vm942
      %v952 = vcombine.low %v914, %v910
      %v953 = vcombine.low %v915, %v911
      %v954 = vcombine.low %v916, %v912
      %v955 = vcombine.low %v917, %v913
      %v960 = vmul.f32 %v263, %v952
      %v961 = vmul.f32 %v264, %v953
      %v962 = vmul.f32 %v265, %v954
      %v963 = vmul.f32 %v266, %v955
      %v968 = vcombine.high %v960, %v960
      %v969 = vcombine.high %v961, %v961
      %v970 = vcombine.high %v962, %v962
      %v971 = vcombine.high %v963, %v963
      %v976 = vsel %vm385, %v960, 0.0
      %v977 = vrot.slane %v976, 4
      %v978 = vadd.f32 %v976, %v977
      %v979 = vrot.slane %v978, 2
      %v980 = vadd.f32 %v978, %v979
      %v981 = vrot.slane %v980, 1
      %v982 = vadd.f32 %v980, %v981
      %v983 = vsel %vm385, %v968, 0.0
      %v984 = vrot.slane %v983, 4
      %v985 = vadd.f32 %v983, %v984
      %v986 = vrot.slane %v985, 2
      %v987 = vadd.f32 %v985, %v986
      %v988 = vrot.slane %v987, 1
      %v989 = vadd.f32 %v987, %v988
      %v990 = vsel %vm385, %v961, 0.0
      %v991 = vrot.slane %v990, 4
      %v992 = vadd.f32 %v990, %v991
      %v993 = vrot.slane %v992, 2
      %v994 = vadd.f32 %v992, %v993
      %v995 = vrot.slane %v994, 1
      %v996 = vadd.f32 %v994, %v995
      %v997 = vsel %vm385, %v969, 0.0
      %v998 = vrot.slane %v997, 4
      %v999 = vadd.f32 %v997, %v998
      %v1000 = vrot.slane %v999, 2
      %v1001 = vadd.f32 %v999, %v1000
      %v1002 = vrot.slane %v1001, 1
      %v1003 = vadd.f32 %v1001, %v1002
      %v1004 = vsel %vm385, %v962, 0.0
      %v1005 = vrot.slane %v1004, 4
      %v1006 = vadd.f32 %v1004, %v1005
      %v1007 = vrot.slane %v1006, 2
      %v1008 = vadd.f32 %v1006, %v1007
      %v1009 = vrot.slane %v1008, 1
      %v1010 = vadd.f32 %v1008, %v1009
      %v1011 = vsel %vm385, %v970, 0.0
      %v1012 = vrot.slane %v1011, 4
      %v1013 = vadd.f32 %v1011, %v1012
      %v1014 = vrot.slane %v1013, 2
      %v1015 = vadd.f32 %v1013, %v1014
      %v1016 = vrot.slane %v1015, 1
      %v1017 = vadd.f32 %v1015, %v1016
      %v1018 = vsel %vm385, %v963, 0.0
      %v1019 = vrot.slane %v1018, 4
      %v1020 = vadd.f32 %v1018, %v1019
      %v1021 = vrot.slane %v1020, 2
      %v1022 = vadd.f32 %v1020, %v1021
      %v1023 = vrot.slane %v1022, 1
      %v1024 = vadd.f32 %v1022, %v1023
      %v1025 = vsel %vm385, %v971, 0.0
      %v1026 = vrot.slane %v1025, 4
      %v1027 = vadd.f32 %v1025, %v1026
      %v1028 = vrot.slane %v1027, 2
      %v1029 = vadd.f32 %v1027, %v1028
      %v1030 = vrot.slane %v1029, 1
      %v1031 = vadd.f32 %v1029, %v1030
      %v1032 = vsel %vm943, 1, 0
      %v1033 = vlaneseq
      %v1034 = vshrl.u32 %v1033, 7
      %v1035 = vsub.s32 0, %v1034
      %v1036 = vrot.slane %v1032, %v1035
      %v1037 = vlaneseq
      %v1038 = vshrl.u32 %v1037, 7
      %v1039 = vsub.s32 1, %v1038
      %v1040 = vrot.slane %v1032, %v1039
      %vm1041 = vcmp.eq.s32.totalorder %v1036, 1
      %vm1042 = vcmp.eq.s32.totalorder %v1040, 1
      %v1051 = vsel %vm461, %v996, %v982
      %v1052 = vsel %vm463, %v1010, %v1051
      %v1053 = vsel %vm465, %v1024, %v1052
      %v1054 = vsel %vm461, %v1003, %v989
      %v1055 = vsel %vm463, %v1017, %v1054
      %v1056 = vsel %vm465, %v1031, %v1055
      %v1059 = vsel %vm1041, %v1053, 0.0
      %v1060 = vsel %vm1042, %v1056, 0.0
      %v1061 = vmax.f32 %v717, %v1059
      %v1062 = vmax.f32 %v718, %v1060
      %v1063 = vsub.f32 %v717, %v1061
      %v1064 = vsub.f32 %v718, %v1062
      %v1065 = vmul.f32 %v1063, 1.442695
      %v1066 = vpow.pop %v1065
      %v1067 = vmul.f32 %v1064, 1.442695
      %v1068 = vpow.pop %v1067
      %v1069 = vsub.f32 %v1059, %v1061
      %v1070 = vsub.f32 %v1060, %v1062
      %v1071 = vmul.f32 %v1069, 1.442695
      %v1072 = vpow.pop %v1071
      %v1073 = vmul.f32 %v1070, 1.442695
      %v1074 = vpow.pop %v1073
      %v1075 = vmul.f32 %v1066, %v731
      %v1076 = vmul.f32 %v1068, %v732
      %v1077 = vadd.f32 %v1075, %v1072
      %v1078 = vadd.f32 %v1076, %v1074
      %v1079 = vsel %vm1041, %v1072, 0.0
      %v1080 = vsel %vm1042, %v1074, 0.0
      %v1083 = vcombine.low %v1066, %v1068
      %v1085 = vunpack.c.l.s4 1966171168
      %v1086 = vunpack.c.0.s8 %v1085
      %v1087 = vlaneseq
      %v1088 = vshrl.u32 %v1087, 7
      %v1089 = vsub.s32 %v1086, %v1088
      %v1090 = vrot.slane %v1083, %v1089
      %v1091 = vcombine.high %v1090, %v1090
      %v1093 = vunpack.c.l.s4 1966171168
      %v1094 = vunpack.c.0.s8 %v1093
      %v1095 = vlaneseq
      %v1096 = vshrl.u32 %v1095, 7
      %v1097 = vsub.s32 %v1094, %v1096
      %v1098 = vrot.slane %v1090, %v1097
      %v1100 = vunpack.c.l.s4 1966171168
      %v1101 = vunpack.c.0.s8 %v1100
      %v1102 = vlaneseq
      %v1103 = vshrl.u32 %v1102, 7
      %v1104 = vsub.s32 %v1101, %v1103
      %v1105 = vrot.slane %v1091, %v1104
      %v1106 = vcombine.high %v1098, %v1098
      %v1107 = vcombine.high %v1105, %v1105
      %v1108 = vlaneseq
      %v1109 = vshrl.u32 %v1108, 7
      %v1110 = vsub.s32 0, %v1109
      %v1111 = vrot.slane %v1098, %v1110
      %v1112 = vlaneseq
      %v1113 = vshrl.u32 %v1112, 7
      %v1114 = vsub.s32 1, %v1113
      %v1115 = vrot.slane %v1098, %v1114
      %v1116 = vlaneseq
      %v1117 = vshrl.u32 %v1116, 7
      %v1118 = vsub.s32 0, %v1117
      %v1119 = vrot.slane %v1105, %v1118
      %v1120 = vlaneseq
      %v1121 = vshrl.u32 %v1120, 7
      %v1122 = vsub.s32 1, %v1121
      %v1123 = vrot.slane %v1105, %v1122
      %v1124 = vlaneseq
      %v1125 = vshrl.u32 %v1124, 7
      %v1126 = vsub.s32 0, %v1125
      %v1127 = vrot.slane %v1106, %v1126
      %v1128 = vlaneseq
      %v1129 = vshrl.u32 %v1128, 7
      %v1130 = vsub.s32 1, %v1129
      %v1131 = vrot.slane %v1106, %v1130
      %v1132 = vlaneseq
      %v1133 = vshrl.u32 %v1132, 7
      %v1134 = vsub.s32 0, %v1133
      %v1135 = vrot.slane %v1107, %v1134
      %v1136 = vlaneseq
      %v1137 = vshrl.u32 %v1136, 7
      %v1138 = vsub.s32 1, %v1137
      %v1139 = vrot.slane %v1107, %v1138
      %v1148 = vmul.f32 %v885, %v1111
      %v1149 = vmul.f32 %v886, %v1115
      %v1150 = vmul.f32 %v887, %v1119
      %v1151 = vmul.f32 %v888, %v1123
      %v1152 = vmul.f32 %v889, %v1127
      %v1153 = vmul.f32 %v890, %v1131
      %v1154 = vmul.f32 %v891, %v1135
      %v1155 = vmul.f32 %v892, %v1139
      %v1158 = vcombine.low %v1079, %v1080
      %v1160 = vunpack.c.l.s4 1966171168
      %v1161 = vunpack.c.0.s8 %v1160
      %v1162 = vlaneseq
      %v1163 = vshrl.u32 %v1162, 7
      %v1164 = vsub.s32 %v1161, %v1163
      %v1165 = vrot.slane %v1158, %v1164
      %v1166 = vcombine.high %v1165, %v1165
      %v1168 = vunpack.c.l.s4 1966171168
      %v1169 = vunpack.c.0.s8 %v1168
      %v1170 = vlaneseq
      %v1171 = vshrl.u32 %v1170, 7
      %v1172 = vsub.s32 %v1169, %v1171
      %v1173 = vrot.slane %v1165, %v1172
      %v1175 = vunpack.c.l.s4 1966171168
      %v1176 = vunpack.c.0.s8 %v1175
      %v1177 = vlaneseq
      %v1178 = vshrl.u32 %v1177, 7
      %v1179 = vsub.s32 %v1176, %v1178
      %v1180 = vrot.slane %v1166, %v1179
      %v1181 = vcombine.high %v1173, %v1173
      %v1182 = vcombine.high %v1180, %v1180
      %v1183 = vlaneseq
      %v1184 = vshrl.u32 %v1183, 7
      %v1185 = vsub.s32 0, %v1184
      %v1186 = vrot.slane %v1173, %v1185
      %v1187 = vlaneseq
      %v1188 = vshrl.u32 %v1187, 7
      %v1189 = vsub.s32 1, %v1188
      %v1190 = vrot.slane %v1173, %v1189
      %v1191 = vlaneseq
      %v1192 = vshrl.u32 %v1191, 7
      %v1193 = vsub.s32 0, %v1192
      %v1194 = vrot.slane %v1180, %v1193
      %v1195 = vlaneseq
      %v1196 = vshrl.u32 %v1195, 7
      %v1197 = vsub.s32 1, %v1196
      %v1198 = vrot.slane %v1180, %v1197
      %v1199 = vlaneseq
      %v1200 = vshrl.u32 %v1199, 7
      %v1201 = vsub.s32 0, %v1200
      %v1202 = vrot.slane %v1181, %v1201
      %v1203 = vlaneseq
      %v1204 = vshrl.u32 %v1203, 7
      %v1205 = vsub.s32 1, %v1204
      %v1206 = vrot.slane %v1181, %v1205
      %v1207 = vlaneseq
      %v1208 = vshrl.u32 %v1207, 7
      %v1209 = vsub.s32 0, %v1208
      %v1210 = vrot.slane %v1182, %v1209
      %v1211 = vlaneseq
      %v1212 = vshrl.u32 %v1211, 7
      %v1213 = vsub.s32 1, %v1212
      %v1214 = vrot.slane %v1182, %v1213
      %v1223 = vmul.f32 %v1186, %v938
      %v1224 = vmul.f32 %v1190, %v934
      %v1225 = vmul.f32 %v1194, %v939
      %v1226 = vmul.f32 %v1198, %v935
      %v1227 = vmul.f32 %v1202, %v940
      %v1228 = vmul.f32 %v1206, %v936
      %v1229 = vmul.f32 %v1210, %v941
      %v1230 = vmul.f32 %v1214, %v937
      %v1231 = vadd.f32 %v1148, %v1223
      %v1232 = vadd.f32 %v1149, %v1224
      %v1233 = vadd.f32 %v1150, %v1225
      %v1234 = vadd.f32 %v1151, %v1226
      %v1235 = vadd.f32 %v1152, %v1227
      %v1236 = vadd.f32 %v1153, %v1228
      %v1237 = vadd.f32 %v1154, %v1229
      %v1238 = vadd.f32 %v1155, %v1230
      %1239 = vrot.lane.b32.xlu0 %v267, 1
      %v1240 = vpop.permute.xlu0 %1239
      %1241 = vrot.lane.b32.xlu0 %v268, 1
      %v1242 = vpop.permute.xlu0 %1241
      %1243 = vrot.lane.b32.xlu0 %v269, 1
      %v1244 = vpop.permute.xlu0 %1243
      %1245 = vrot.lane.b32.xlu0 %v270, 1
      %v1246 = vpop.permute.xlu0 %1245
      %1247 = vrot.lane.b32.xlu0 %v279, 1
      %v1248 = vpop.permute.xlu0 %1247
      %1249 = vrot.lane.b32.xlu0 %v280, 1
      %v1250 = vpop.permute.xlu0 %1249
      %1251 = vrot.lane.b32.xlu0 %v281, 1
      %v1252 = vpop.permute.xlu0 %1251
      %1253 = vrot.lane.b32.xlu0 %v282, 1
      %v1254 = vpop.permute.xlu0 %1253
      %vm1255 = vcmp.lt.s32.totalorder %v304, 1
      %v1256 = vsel %vm1255, %v1240, %v1248
      %v1257 = vsel %vm1255, %v1242, %v1250
      %v1258 = vsel %vm1255, %v1244, %v1252
      %v1259 = vsel %vm1255, %v1246, %v1254
      %v1260 = vsel %vm1255, %v1248, %v1240
      %v1261 = vsel %vm1255, %v1250, %v1242
      %v1262 = vsel %vm1255, %v1252, %v1244
      %v1263 = vsel %vm1255, %v1254, %v1246
      %1264 = vrot.lane.b32.xlu0 %v271, 1
      %v1265 = vpop.permute.xlu0 %1264
      %1266 = vrot.lane.b32.xlu0 %v272, 1
      %v1267 = vpop.permute.xlu0 %1266
      %1268 = vrot.lane.b32.xlu0 %v273, 1
      %v1269 = vpop.permute.xlu0 %1268
      %1270 = vrot.lane.b32.xlu0 %v274, 1
      %v1271 = vpop.permute.xlu0 %1270
      %1272 = vrot.lane.b32.xlu0 %v318, 1
      %v1273 = vpop.permute.xlu0 %1272
      %1274 = vrot.lane.b32.xlu0 %v319, 1
      %v1275 = vpop.permute.xlu0 %1274
      %1276 = vrot.lane.b32.xlu0 %v320, 1
      %v1277 = vpop.permute.xlu0 %1276
      %1278 = vrot.lane.b32.xlu0 %v321, 1
      %v1279 = vpop.permute.xlu0 %1278
      %v1280 = vsel %vm1255, %v1265, %v1273
      %v1281 = vsel %vm1255, %v1267, %v1275
      %v1282 = vsel %vm1255, %v1269, %v1277
      %v1283 = vsel %vm1255, %v1271, %v1279
      %v1284 = vsel %vm1255, %v1273, %v1265
      %v1285 = vsel %vm1255, %v1275, %v1267
      %v1286 = vsel %vm1255, %v1277, %v1269
      %v1287 = vsel %vm1255, %v1279, %v1271
      %v1296 = vcombine.low %v1260, %v1256
      %v1297 = vcombine.low %v1261, %v1257
      %v1298 = vcombine.low %v1262, %v1258
      %v1299 = vcombine.low %v1263, %v1259
      %v1304 = vmul.f32 %v263, %v1296
      %v1305 = vmul.f32 %v264, %v1297
      %v1306 = vmul.f32 %v265, %v1298
      %v1307 = vmul.f32 %v266, %v1299
      %v1312 = vcombine.high %v1304, %v1304
      %v1313 = vcombine.high %v1305, %v1305
      %v1314 = vcombine.high %v1306, %v1306
      %v1315 = vcombine.high %v1307, %v1307
      %v1320 = vsel %vm385, %v1304, 0.0
      %v1321 = vrot.slane %v1320, 4
      %v1322 = vadd.f32 %v1320, %v1321
      %v1323 = vrot.slane %v1322, 2
      %v1324 = vadd.f32 %v1322, %v1323
      %v1325 = vrot.slane %v1324, 1
      %v1326 = vadd.f32 %v1324, %v1325
      %v1327 = vsel %vm385, %v1312, 0.0
      %v1328 = vrot.slane %v1327, 4
      %v1329 = vadd.f32 %v1327, %v1328
      %v1330 = vrot.slane %v1329, 2
      %v1331 = vadd.f32 %v1329, %v1330
      %v1332 = vrot.slane %v1331, 1
      %v1333 = vadd.f32 %v1331, %v1332
      %v1334 = vsel %vm385, %v1305, 0.0
      %v1335 = vrot.slane %v1334, 4
      %v1336 = vadd.f32 %v1334, %v1335
      %v1337 = vrot.slane %v1336, 2
      %v1338 = vadd.f32 %v1336, %v1337
      %v1339 = vrot.slane %v1338, 1
      %v1340 = vadd.f32 %v1338, %v1339
      %v1341 = vsel %vm385, %v1313, 0.0
      %v1342 = vrot.slane %v1341, 4
      %v1343 = vadd.f32 %v1341, %v1342
      %v1344 = vrot.slane %v1343, 2
      %v1345 = vadd.f32 %v1343, %v1344
      %v1346 = vrot.slane %v1345, 1
      %v1347 = vadd.f32 %v1345, %v1346
      %v1348 = vsel %vm385, %v1306, 0.0
      %v1349 = vrot.slane %v1348, 4
      %v1350 = vadd.f32 %v1348, %v1349
      %v1351 = vrot.slane %v1350, 2
      %v1352 = vadd.f32 %v1350, %v1351
      %v1353 = vrot.slane %v1352, 1
      %v1354 = vadd.f32 %v1352, %v1353
      %v1355 = vsel %vm385, %v1314, 0.0
      %v1356 = vrot.slane %v1355, 4
      %v1357 = vadd.f32 %v1355, %v1356
      %v1358 = vrot.slane %v1357, 2
      %v1359 = vadd.f32 %v1357, %v1358
      %v1360 = vrot.slane %v1359, 1
      %v1361 = vadd.f32 %v1359, %v1360
      %v1362 = vsel %vm385, %v1307, 0.0
      %v1363 = vrot.slane %v1362, 4
      %v1364 = vadd.f32 %v1362, %v1363
      %v1365 = vrot.slane %v1364, 2
      %v1366 = vadd.f32 %v1364, %v1365
      %v1367 = vrot.slane %v1366, 1
      %v1368 = vadd.f32 %v1366, %v1367
      %v1369 = vsel %vm385, %v1315, 0.0
      %v1370 = vrot.slane %v1369, 4
      %v1371 = vadd.f32 %v1369, %v1370
      %v1372 = vrot.slane %v1371, 2
      %v1373 = vadd.f32 %v1371, %v1372
      %v1374 = vrot.slane %v1373, 1
      %v1375 = vadd.f32 %v1373, %v1374
      %v1376 = vsel %vm351, 1, 0
      %v1377 = vlaneseq
      %v1378 = vshrl.u32 %v1377, 7
      %v1379 = vsub.s32 0, %v1378
      %v1380 = vrot.slane %v1376, %v1379
      %v1381 = vlaneseq
      %v1382 = vshrl.u32 %v1381, 7
      %v1383 = vsub.s32 1, %v1382
      %v1384 = vrot.slane %v1376, %v1383
      %vm1385 = vcmp.eq.s32.totalorder %v1380, 1
      %vm1386 = vcmp.eq.s32.totalorder %v1384, 1
      %v1395 = vsel %vm461, %v1340, %v1326
      %v1396 = vsel %vm463, %v1354, %v1395
      %v1397 = vsel %vm465, %v1368, %v1396
      %v1398 = vsel %vm461, %v1347, %v1333
      %v1399 = vsel %vm463, %v1361, %v1398
      %v1400 = vsel %vm465, %v1375, %v1399
      %v1403 = vsel %vm1385, %v1397, 0.0
      %v1404 = vsel %vm1386, %v1400, 0.0
      %v1405 = vmax.f32 %v1061, %v1403
      %v1406 = vmax.f32 %v1062, %v1404
      %v1407 = vsub.f32 %v1061, %v1405
      %v1408 = vsub.f32 %v1062, %v1406
      %v1409 = vmul.f32 %v1407, 1.442695
      %v1410 = vpow.pop %v1409
      %v1411 = vmul.f32 %v1408, 1.442695
      %v1412 = vpow.pop %v1411
      %v1413 = vsub.f32 %v1403, %v1405
      %v1414 = vsub.f32 %v1404, %v1406
      %v1415 = vmul.f32 %v1413, 1.442695
      %v1416 = vpow.pop %v1415
      %v1417 = vmul.f32 %v1414, 1.442695
      %v1418 = vpow.pop %v1417
      %v1419 = vmul.f32 %v1410, %v1077
      %v1420 = vmul.f32 %v1412, %v1078
      %v1421 = vadd.f32 %v1419, %v1416
      %v1422 = vadd.f32 %v1420, %v1418
      %v1423 = vsel %vm1385, %v1416, 0.0
      %v1424 = vsel %vm1386, %v1418, 0.0
      %v1427 = vcombine.low %v1410, %v1412
      %v1429 = vunpack.c.l.s4 1966171168
      %v1430 = vunpack.c.0.s8 %v1429
      %v1431 = vlaneseq
      %v1432 = vshrl.u32 %v1431, 7
      %v1433 = vsub.s32 %v1430, %v1432
      %v1434 = vrot.slane %v1427, %v1433
      %v1435 = vcombine.high %v1434, %v1434
      %v1437 = vunpack.c.l.s4 1966171168
      %v1438 = vunpack.c.0.s8 %v1437
      %v1439 = vlaneseq
      %v1440 = vshrl.u32 %v1439, 7
      %v1441 = vsub.s32 %v1438, %v1440
      %v1442 = vrot.slane %v1434, %v1441
      %v1444 = vunpack.c.l.s4 1966171168
      %v1445 = vunpack.c.0.s8 %v1444
      %v1446 = vlaneseq
      %v1447 = vshrl.u32 %v1446, 7
      %v1448 = vsub.s32 %v1445, %v1447
      %v1449 = vrot.slane %v1435, %v1448
      %v1450 = vcombine.high %v1442, %v1442
      %v1451 = vcombine.high %v1449, %v1449
      %v1452 = vlaneseq
      %v1453 = vshrl.u32 %v1452, 7
      %v1454 = vsub.s32 0, %v1453
      %v1455 = vrot.slane %v1442, %v1454
      %v1456 = vlaneseq
      %v1457 = vshrl.u32 %v1456, 7
      %v1458 = vsub.s32 1, %v1457
      %v1459 = vrot.slane %v1442, %v1458
      %v1460 = vlaneseq
      %v1461 = vshrl.u32 %v1460, 7
      %v1462 = vsub.s32 0, %v1461
      %v1463 = vrot.slane %v1449, %v1462
      %v1464 = vlaneseq
      %v1465 = vshrl.u32 %v1464, 7
      %v1466 = vsub.s32 1, %v1465
      %v1467 = vrot.slane %v1449, %v1466
      %v1468 = vlaneseq
      %v1469 = vshrl.u32 %v1468, 7
      %v1470 = vsub.s32 0, %v1469
      %v1471 = vrot.slane %v1450, %v1470
      %v1472 = vlaneseq
      %v1473 = vshrl.u32 %v1472, 7
      %v1474 = vsub.s32 1, %v1473
      %v1475 = vrot.slane %v1450, %v1474
      %v1476 = vlaneseq
      %v1477 = vshrl.u32 %v1476, 7
      %v1478 = vsub.s32 0, %v1477
      %v1479 = vrot.slane %v1451, %v1478
      %v1480 = vlaneseq
      %v1481 = vshrl.u32 %v1480, 7
      %v1482 = vsub.s32 1, %v1481
      %v1483 = vrot.slane %v1451, %v1482
      %v1492 = vmul.f32 %v1231, %v1455
      %v1493 = vmul.f32 %v1232, %v1459
      %v1494 = vmul.f32 %v1233, %v1463
      %v1495 = vmul.f32 %v1234, %v1467
      %v1496 = vmul.f32 %v1235, %v1471
      %v1497 = vmul.f32 %v1236, %v1475
      %v1498 = vmul.f32 %v1237, %v1479
      %v1499 = vmul.f32 %v1238, %v1483
      %v1502 = vcombine.low %v1423, %v1424
      %v1504 = vunpack.c.l.s4 1966171168
      %v1505 = vunpack.c.0.s8 %v1504
      %v1506 = vlaneseq
      %v1507 = vshrl.u32 %v1506, 7
      %v1508 = vsub.s32 %v1505, %v1507
      %v1509 = vrot.slane %v1502, %v1508
      %v1510 = vcombine.high %v1509, %v1509
      %v1512 = vunpack.c.l.s4 1966171168
      %v1513 = vunpack.c.0.s8 %v1512
      %v1514 = vlaneseq
      %v1515 = vshrl.u32 %v1514, 7
      %v1516 = vsub.s32 %v1513, %v1515
      %v1517 = vrot.slane %v1509, %v1516
      %v1519 = vunpack.c.l.s4 1966171168
      %v1520 = vunpack.c.0.s8 %v1519
      %v1521 = vlaneseq
      %v1522 = vshrl.u32 %v1521, 7
      %v1523 = vsub.s32 %v1520, %v1522
      %v1524 = vrot.slane %v1510, %v1523
      %v1525 = vcombine.high %v1517, %v1517
      %v1526 = vcombine.high %v1524, %v1524
      %v1527 = vlaneseq
      %v1528 = vshrl.u32 %v1527, 7
      %v1529 = vsub.s32 0, %v1528
      %v1530 = vrot.slane %v1517, %v1529
      %v1531 = vlaneseq
      %v1532 = vshrl.u32 %v1531, 7
      %v1533 = vsub.s32 1, %v1532
      %v1534 = vrot.slane %v1517, %v1533
      %v1535 = vlaneseq
      %v1536 = vshrl.u32 %v1535, 7
      %v1537 = vsub.s32 0, %v1536
      %v1538 = vrot.slane %v1524, %v1537
      %v1539 = vlaneseq
      %v1540 = vshrl.u32 %v1539, 7
      %v1541 = vsub.s32 1, %v1540
      %v1542 = vrot.slane %v1524, %v1541
      %v1543 = vlaneseq
      %v1544 = vshrl.u32 %v1543, 7
      %v1545 = vsub.s32 0, %v1544
      %v1546 = vrot.slane %v1525, %v1545
      %v1547 = vlaneseq
      %v1548 = vshrl.u32 %v1547, 7
      %v1549 = vsub.s32 1, %v1548
      %v1550 = vrot.slane %v1525, %v1549
      %v1551 = vlaneseq
      %v1552 = vshrl.u32 %v1551, 7
      %v1553 = vsub.s32 0, %v1552
      %v1554 = vrot.slane %v1526, %v1553
      %v1555 = vlaneseq
      %v1556 = vshrl.u32 %v1555, 7
      %v1557 = vsub.s32 1, %v1556
      %v1558 = vrot.slane %v1526, %v1557
      %v1567 = vmul.f32 %v1530, %v1284
      %v1568 = vmul.f32 %v1534, %v1280
      %v1569 = vmul.f32 %v1538, %v1285
      %v1570 = vmul.f32 %v1542, %v1281
      %v1571 = vmul.f32 %v1546, %v1286
      %v1572 = vmul.f32 %v1550, %v1282
      %v1573 = vmul.f32 %v1554, %v1287
      %v1574 = vmul.f32 %v1558, %v1283
      %v1575 = vadd.f32 %v1492, %v1567
      %v1576 = vadd.f32 %v1493, %v1568
      %v1577 = vadd.f32 %v1494, %v1569
      %v1578 = vadd.f32 %v1495, %v1570
      %v1579 = vadd.f32 %v1496, %v1571
      %v1580 = vadd.f32 %v1497, %v1572
      %v1581 = vadd.f32 %v1498, %v1573
      %v1582 = vadd.f32 %v1499, %v1574
      %v1583 = vmul.f32 %v263, %v267
      %v1584 = vmul.f32 %v264, %v268
      %v1585 = vmul.f32 %v265, %v269
      %v1586 = vmul.f32 %v266, %v270
      %v1591 = vcombine.high %v1583, %v1583
      %v1592 = vcombine.high %v1584, %v1584
      %v1593 = vcombine.high %v1585, %v1585
      %v1594 = vcombine.high %v1586, %v1586
      %v1599 = vsel %vm385, %v1583, 0.0
      %v1600 = vrot.slane %v1599, 4
      %v1601 = vadd.f32 %v1599, %v1600
      %v1602 = vrot.slane %v1601, 2
      %v1603 = vadd.f32 %v1601, %v1602
      %v1604 = vrot.slane %v1603, 1
      %v1605 = vadd.f32 %v1603, %v1604
      %v1606 = vsel %vm385, %v1591, 0.0
      %v1607 = vrot.slane %v1606, 4
      %v1608 = vadd.f32 %v1606, %v1607
      %v1609 = vrot.slane %v1608, 2
      %v1610 = vadd.f32 %v1608, %v1609
      %v1611 = vrot.slane %v1610, 1
      %v1612 = vadd.f32 %v1610, %v1611
      %v1613 = vsel %vm385, %v1584, 0.0
      %v1614 = vrot.slane %v1613, 4
      %v1615 = vadd.f32 %v1613, %v1614
      %v1616 = vrot.slane %v1615, 2
      %v1617 = vadd.f32 %v1615, %v1616
      %v1618 = vrot.slane %v1617, 1
      %v1619 = vadd.f32 %v1617, %v1618
      %v1620 = vsel %vm385, %v1592, 0.0
      %v1621 = vrot.slane %v1620, 4
      %v1622 = vadd.f32 %v1620, %v1621
      %v1623 = vrot.slane %v1622, 2
      %v1624 = vadd.f32 %v1622, %v1623
      %v1625 = vrot.slane %v1624, 1
      %v1626 = vadd.f32 %v1624, %v1625
      %v1627 = vsel %vm385, %v1585, 0.0
      %v1628 = vrot.slane %v1627, 4
      %v1629 = vadd.f32 %v1627, %v1628
      %v1630 = vrot.slane %v1629, 2
      %v1631 = vadd.f32 %v1629, %v1630
      %v1632 = vrot.slane %v1631, 1
      %v1633 = vadd.f32 %v1631, %v1632
      %v1634 = vsel %vm385, %v1593, 0.0
      %v1635 = vrot.slane %v1634, 4
      %v1636 = vadd.f32 %v1634, %v1635
      %v1637 = vrot.slane %v1636, 2
      %v1638 = vadd.f32 %v1636, %v1637
      %v1639 = vrot.slane %v1638, 1
      %v1640 = vadd.f32 %v1638, %v1639
      %v1641 = vsel %vm385, %v1586, 0.0
      %v1642 = vrot.slane %v1641, 4
      %v1643 = vadd.f32 %v1641, %v1642
      %v1644 = vrot.slane %v1643, 2
      %v1645 = vadd.f32 %v1643, %v1644
      %v1646 = vrot.slane %v1645, 1
      %v1647 = vadd.f32 %v1645, %v1646
      %v1648 = vsel %vm385, %v1594, 0.0
      %v1649 = vrot.slane %v1648, 4
      %v1650 = vadd.f32 %v1648, %v1649
      %v1651 = vrot.slane %v1650, 2
      %v1652 = vadd.f32 %v1650, %v1651
      %v1653 = vrot.slane %v1652, 1
      %v1654 = vadd.f32 %v1652, %v1653
      %v1663 = vsel %vm461, %v1619, %v1605
      %v1664 = vsel %vm463, %v1633, %v1663
      %v1665 = vsel %vm465, %v1647, %v1664
      %v1666 = vsel %vm461, %v1626, %v1612
      %v1667 = vsel %vm463, %v1640, %v1666
      %v1668 = vsel %vm465, %v1654, %v1667
      %v1671 = vmax.f32 %v1405, %v1665
      %v1672 = vmax.f32 %v1406, %v1668
      %v1673 = vsub.f32 %v1405, %v1671
      %v1674 = vsub.f32 %v1406, %v1672
      %v1675 = vmul.f32 %v1673, 1.442695
      %v1676 = vpow.pop %v1675
      %v1677 = vmul.f32 %v1674, 1.442695
      %v1678 = vpow.pop %v1677
      %v1681 = vrot.slane %v1671, 1
      %v1682 = vrot.slane %v1672, 1
      %v1683 = vrot.slane %v1671, 2
      %v1684 = vrot.slane %v1672, 2
      %v1685 = vrot.slane %v1671, 3
      %v1686 = vrot.slane %v1672, 3
      %v1695 = vsub.f32 %v1605, %v1671
      %v1696 = vsub.f32 %v1612, %v1672
      %v1697 = vsub.f32 %v1619, %v1681
      %v1698 = vsub.f32 %v1626, %v1682
      %v1699 = vsub.f32 %v1633, %v1683
      %v1700 = vsub.f32 %v1640, %v1684
      %v1701 = vsub.f32 %v1647, %v1685
      %v1702 = vsub.f32 %v1654, %v1686
      %v1703 = vmul.f32 %v1695, 1.442695
      %v1704 = vpow.pop %v1703
      %v1705 = vmul.f32 %v1696, 1.442695
      %v1706 = vpow.pop %v1705
      %v1707 = vmul.f32 %v1697, 1.442695
      %v1708 = vpow.pop %v1707
      %v1709 = vmul.f32 %v1698, 1.442695
      %v1710 = vpow.pop %v1709
      %v1711 = vmul.f32 %v1699, 1.442695
      %v1712 = vpow.pop %v1711
      %v1713 = vmul.f32 %v1700, 1.442695
      %v1714 = vpow.pop %v1713
      %v1715 = vmul.f32 %v1701, 1.442695
      %v1716 = vpow.pop %v1715
      %v1717 = vmul.f32 %v1702, 1.442695
      %v1718 = vpow.pop %v1717
      %v1719 = vmul.f32 %v1676, %v1421
      %v1720 = vmul.f32 %v1678, %v1422
      %v1729 = vrot.slane %v1708, 7
      %v1730 = vsel %vm461, %v1729, %v1704
      %v1731 = vrot.slane %v1712, 6
      %v1732 = vsel %vm463, %v1731, %v1730
      %v1733 = vrot.slane %v1716, 5
      %v1734 = vsel %vm465, %v1733, %v1732
      %v1735 = vrot.slane %v1710, 7
      %v1736 = vsel %vm461, %v1735, %v1706
      %v1737 = vrot.slane %v1714, 6
      %v1738 = vsel %vm463, %v1737, %v1736
      %v1739 = vrot.slane %v1718, 5
      %v1740 = vsel %vm465, %v1739, %v1738
      %v1743 = vadd.f32 %v1719, %v1734
      %v1744 = vadd.f32 %v1720, %v1740
      %v1747 = vcombine.low %v1676, %v1678
      %v1749 = vunpack.c.l.s4 1966171168
      %v1750 = vunpack.c.0.s8 %v1749
      %v1751 = vlaneseq
      %v1752 = vshrl.u32 %v1751, 7
      %v1753 = vsub.s32 %v1750, %v1752
      %v1754 = vrot.slane %v1747, %v1753
      %v1755 = vcombine.high %v1754, %v1754
      %v1757 = vunpack.c.l.s4 1966171168
      %v1758 = vunpack.c.0.s8 %v1757
      %v1759 = vlaneseq
      %v1760 = vshrl.u32 %v1759, 7
      %v1761 = vsub.s32 %v1758, %v1760
      %v1762 = vrot.slane %v1754, %v1761
      %v1764 = vunpack.c.l.s4 1966171168
      %v1765 = vunpack.c.0.s8 %v1764
      %v1766 = vlaneseq
      %v1767 = vshrl.u32 %v1766, 7
      %v1768 = vsub.s32 %v1765, %v1767
      %v1769 = vrot.slane %v1755, %v1768
      %v1770 = vcombine.high %v1762, %v1762
      %v1771 = vcombine.high %v1769, %v1769
      %v1772 = vlaneseq
      %v1773 = vshrl.u32 %v1772, 7
      %v1774 = vsub.s32 0, %v1773
      %v1775 = vrot.slane %v1762, %v1774
      %v1776 = vlaneseq
      %v1777 = vshrl.u32 %v1776, 7
      %v1778 = vsub.s32 1, %v1777
      %v1779 = vrot.slane %v1762, %v1778
      %v1780 = vlaneseq
      %v1781 = vshrl.u32 %v1780, 7
      %v1782 = vsub.s32 0, %v1781
      %v1783 = vrot.slane %v1769, %v1782
      %v1784 = vlaneseq
      %v1785 = vshrl.u32 %v1784, 7
      %v1786 = vsub.s32 1, %v1785
      %v1787 = vrot.slane %v1769, %v1786
      %v1788 = vlaneseq
      %v1789 = vshrl.u32 %v1788, 7
      %v1790 = vsub.s32 0, %v1789
      %v1791 = vrot.slane %v1770, %v1790
      %v1792 = vlaneseq
      %v1793 = vshrl.u32 %v1792, 7
      %v1794 = vsub.s32 1, %v1793
      %v1795 = vrot.slane %v1770, %v1794
      %v1796 = vlaneseq
      %v1797 = vshrl.u32 %v1796, 7
      %v1798 = vsub.s32 0, %v1797
      %v1799 = vrot.slane %v1771, %v1798
      %v1800 = vlaneseq
      %v1801 = vshrl.u32 %v1800, 7
      %v1802 = vsub.s32 1, %v1801
      %v1803 = vrot.slane %v1771, %v1802
      %v1812 = vmul.f32 %v1575, %v1775
      %v1813 = vmul.f32 %v1576, %v1779
      %v1814 = vmul.f32 %v1577, %v1783
      %v1815 = vmul.f32 %v1578, %v1787
      %v1816 = vmul.f32 %v1579, %v1791
      %v1817 = vmul.f32 %v1580, %v1795
      %v1818 = vmul.f32 %v1581, %v1799
      %v1819 = vmul.f32 %v1582, %v1803
      %v1820 = vlaneseq
      %v1821 = vshrl.u32 %v1820, 7
      %v1822 = vsub.s32 0, %v1821
      %v1823 = vrot.slane %v1704, %v1822
      %v1824 = vlaneseq
      %v1825 = vshrl.u32 %v1824, 7
      %v1826 = vsub.s32 0, %v1825
      %v1827 = vrot.slane %v1706, %v1826
      %v1828 = vlaneseq
      %v1829 = vshrl.u32 %v1828, 7
      %v1830 = vsub.s32 0, %v1829
      %v1831 = vrot.slane %v1708, %v1830
      %v1832 = vlaneseq
      %v1833 = vshrl.u32 %v1832, 7
      %v1834 = vsub.s32 0, %v1833
      %v1835 = vrot.slane %v1710, %v1834
      %v1836 = vlaneseq
      %v1837 = vshrl.u32 %v1836, 7
      %v1838 = vsub.s32 0, %v1837
      %v1839 = vrot.slane %v1712, %v1838
      %v1840 = vlaneseq
      %v1841 = vshrl.u32 %v1840, 7
      %v1842 = vsub.s32 0, %v1841
      %v1843 = vrot.slane %v1714, %v1842
      %v1844 = vlaneseq
      %v1845 = vshrl.u32 %v1844, 7
      %v1846 = vsub.s32 0, %v1845
      %v1847 = vrot.slane %v1716, %v1846
      %v1848 = vlaneseq
      %v1849 = vshrl.u32 %v1848, 7
      %v1850 = vsub.s32 0, %v1849
      %v1851 = vrot.slane %v1718, %v1850
      %v1852 = vmul.f32 %v1823, %v271
      %v1853 = vmul.f32 %v1827, %v318
      %v1854 = vmul.f32 %v1831, %v272
      %v1855 = vmul.f32 %v1835, %v319
      %v1856 = vmul.f32 %v1839, %v273
      %v1857 = vmul.f32 %v1843, %v320
      %v1858 = vmul.f32 %v1847, %v274
      %v1859 = vmul.f32 %v1851, %v321
      %v1860 = vadd.f32 %v1812, %v1852
      %v1861 = vadd.f32 %v1813, %v1853
      %v1862 = vadd.f32 %v1814, %v1854
      %v1863 = vadd.f32 %v1815, %v1855
      %v1864 = vadd.f32 %v1816, %v1856
      %v1865 = vadd.f32 %v1817, %v1857
      %v1866 = vadd.f32 %v1818, %v1858
      %v1867 = vadd.f32 %v1819, %v1859
      %1868 = vrot.lane.b32.xlu0 %v267, 127
      %v1869 = vpop.permute.xlu0 %1868
      %1870 = vrot.lane.b32.xlu0 %v268, 127
      %v1871 = vpop.permute.xlu0 %1870
      %1872 = vrot.lane.b32.xlu0 %v269, 127
      %v1873 = vpop.permute.xlu0 %1872
      %1874 = vrot.lane.b32.xlu0 %v270, 127
      %v1875 = vpop.permute.xlu0 %1874
      %1876 = vrot.lane.b32.xlu0 %v279, 127
      %v1877 = vpop.permute.xlu0 %1876
      %1878 = vrot.lane.b32.xlu0 %v280, 127
      %v1879 = vpop.permute.xlu0 %1878
      %1880 = vrot.lane.b32.xlu0 %v281, 127
      %v1881 = vpop.permute.xlu0 %1880
      %1882 = vrot.lane.b32.xlu0 %v282, 127
      %v1883 = vpop.permute.xlu0 %1882
      %vm1884 = vcmp.lt.s32.totalorder %v304, 127
      %v1885 = vsel %vm1884, %v1869, %v1877
      %v1886 = vsel %vm1884, %v1871, %v1879
      %v1887 = vsel %vm1884, %v1873, %v1881
      %v1888 = vsel %vm1884, %v1875, %v1883
      %v1889 = vsel %vm1884, %v1877, %v1869
      %v1890 = vsel %vm1884, %v1879, %v1871
      %v1891 = vsel %vm1884, %v1881, %v1873
      %v1892 = vsel %vm1884, %v1883, %v1875
      %1893 = vrot.lane.b32.xlu0 %v271, 127
      %v1894 = vpop.permute.xlu0 %1893
      %1895 = vrot.lane.b32.xlu0 %v272, 127
      %v1896 = vpop.permute.xlu0 %1895
      %1897 = vrot.lane.b32.xlu0 %v273, 127
      %v1898 = vpop.permute.xlu0 %1897
      %1899 = vrot.lane.b32.xlu0 %v274, 127
      %v1900 = vpop.permute.xlu0 %1899
      %1901 = vrot.lane.b32.xlu0 %v318, 127
      %v1902 = vpop.permute.xlu0 %1901
      %1903 = vrot.lane.b32.xlu0 %v319, 127
      %v1904 = vpop.permute.xlu0 %1903
      %1905 = vrot.lane.b32.xlu0 %v320, 127
      %v1906 = vpop.permute.xlu0 %1905
      %1907 = vrot.lane.b32.xlu0 %v321, 127
      %v1908 = vpop.permute.xlu0 %1907
      %v1909 = vsel %vm1884, %v1894, %v1902
      %v1910 = vsel %vm1884, %v1896, %v1904
      %v1911 = vsel %vm1884, %v1898, %v1906
      %v1912 = vsel %vm1884, %v1900, %v1908
      %v1913 = vsel %vm1884, %v1902, %v1894
      %v1914 = vsel %vm1884, %v1904, %v1896
      %v1915 = vsel %vm1884, %v1906, %v1898
      %v1916 = vsel %vm1884, %v1908, %v1900
      %v1925 = vcombine.low %v1885, %v1889
      %v1926 = vcombine.low %v1886, %v1890
      %v1927 = vcombine.low %v1887, %v1891
      %v1928 = vcombine.low %v1888, %v1892
      %v1933 = vmul.f32 %v263, %v1925
      %v1934 = vmul.f32 %v264, %v1926
      %v1935 = vmul.f32 %v265, %v1927
      %v1936 = vmul.f32 %v266, %v1928
      %v1941 = vcombine.high %v1933, %v1933
      %v1942 = vcombine.high %v1934, %v1934
      %v1943 = vcombine.high %v1935, %v1935
      %v1944 = vcombine.high %v1936, %v1936
      %v1949 = vsel %vm385, %v1933, 0.0
      %v1950 = vrot.slane %v1949, 4
      %v1951 = vadd.f32 %v1949, %v1950
      %v1952 = vrot.slane %v1951, 2
      %v1953 = vadd.f32 %v1951, %v1952
      %v1954 = vrot.slane %v1953, 1
      %v1955 = vadd.f32 %v1953, %v1954
      %v1956 = vsel %vm385, %v1941, 0.0
      %v1957 = vrot.slane %v1956, 4
      %v1958 = vadd.f32 %v1956, %v1957
      %v1959 = vrot.slane %v1958, 2
      %v1960 = vadd.f32 %v1958, %v1959
      %v1961 = vrot.slane %v1960, 1
      %v1962 = vadd.f32 %v1960, %v1961
      %v1963 = vsel %vm385, %v1934, 0.0
      %v1964 = vrot.slane %v1963, 4
      %v1965 = vadd.f32 %v1963, %v1964
      %v1966 = vrot.slane %v1965, 2
      %v1967 = vadd.f32 %v1965, %v1966
      %v1968 = vrot.slane %v1967, 1
      %v1969 = vadd.f32 %v1967, %v1968
      %v1970 = vsel %vm385, %v1942, 0.0
      %v1971 = vrot.slane %v1970, 4
      %v1972 = vadd.f32 %v1970, %v1971
      %v1973 = vrot.slane %v1972, 2
      %v1974 = vadd.f32 %v1972, %v1973
      %v1975 = vrot.slane %v1974, 1
      %v1976 = vadd.f32 %v1974, %v1975
      %v1977 = vsel %vm385, %v1935, 0.0
      %v1978 = vrot.slane %v1977, 4
      %v1979 = vadd.f32 %v1977, %v1978
      %v1980 = vrot.slane %v1979, 2
      %v1981 = vadd.f32 %v1979, %v1980
      %v1982 = vrot.slane %v1981, 1
      %v1983 = vadd.f32 %v1981, %v1982
      %v1984 = vsel %vm385, %v1943, 0.0
      %v1985 = vrot.slane %v1984, 4
      %v1986 = vadd.f32 %v1984, %v1985
      %v1987 = vrot.slane %v1986, 2
      %v1988 = vadd.f32 %v1986, %v1987
      %v1989 = vrot.slane %v1988, 1
      %v1990 = vadd.f32 %v1988, %v1989
      %v1991 = vsel %vm385, %v1936, 0.0
      %v1992 = vrot.slane %v1991, 4
      %v1993 = vadd.f32 %v1991, %v1992
      %v1994 = vrot.slane %v1993, 2
      %v1995 = vadd.f32 %v1993, %v1994
      %v1996 = vrot.slane %v1995, 1
      %v1997 = vadd.f32 %v1995, %v1996
      %v1998 = vsel %vm385, %v1944, 0.0
      %v1999 = vrot.slane %v1998, 4
      %v2000 = vadd.f32 %v1998, %v1999
      %v2001 = vrot.slane %v2000, 2
      %v2002 = vadd.f32 %v2000, %v2001
      %v2003 = vrot.slane %v2002, 1
      %v2004 = vadd.f32 %v2002, %v2003
      %v2005 = vsel %vm942, 1, 0
      %v2006 = vlaneseq
      %v2007 = vshrl.u32 %v2006, 7
      %v2008 = vsub.s32 0, %v2007
      %v2009 = vrot.slane %v2005, %v2008
      %v2010 = vlaneseq
      %v2011 = vshrl.u32 %v2010, 7
      %v2012 = vsub.s32 1, %v2011
      %v2013 = vrot.slane %v2005, %v2012
      %vm2014 = vcmp.eq.s32.totalorder %v2009, 1
      %vm2015 = vcmp.eq.s32.totalorder %v2013, 1
      %v2024 = vsel %vm461, %v1969, %v1955
      %v2025 = vsel %vm463, %v1983, %v2024
      %v2026 = vsel %vm465, %v1997, %v2025
      %v2027 = vsel %vm461, %v1976, %v1962
      %v2028 = vsel %vm463, %v1990, %v2027
      %v2029 = vsel %vm465, %v2004, %v2028
      %v2032 = vsel %vm2014, %v2026, 0.0
      %v2033 = vsel %vm2015, %v2029, 0.0
      %v2034 = vmax.f32 %v1671, %v2032
      %v2035 = vmax.f32 %v1672, %v2033
      %v2036 = vsub.f32 %v1671, %v2034
      %v2037 = vsub.f32 %v1672, %v2035
      %v2038 = vmul.f32 %v2036, 1.442695
      %v2039 = vpow.pop %v2038
      %v2040 = vmul.f32 %v2037, 1.442695
      %v2041 = vpow.pop %v2040
      %v2042 = vsub.f32 %v2032, %v2034
      %v2043 = vsub.f32 %v2033, %v2035
      %v2044 = vmul.f32 %v2042, 1.442695
      %v2045 = vpow.pop %v2044
      %v2046 = vmul.f32 %v2043, 1.442695
      %v2047 = vpow.pop %v2046
      %v2048 = vmul.f32 %v2039, %v1743
      %v2049 = vmul.f32 %v2041, %v1744
      %v2050 = vadd.f32 %v2048, %v2045
      %v2051 = vadd.f32 %v2049, %v2047
      %v2052 = vsel %vm2014, %v2045, 0.0
      %v2053 = vsel %vm2015, %v2047, 0.0
      %v2056 = vcombine.low %v2039, %v2041
      %v2058 = vunpack.c.l.s4 1966171168
      %v2059 = vunpack.c.0.s8 %v2058
      %v2060 = vlaneseq
      %v2061 = vshrl.u32 %v2060, 7
      %v2062 = vsub.s32 %v2059, %v2061
      %v2063 = vrot.slane %v2056, %v2062
      %v2064 = vcombine.high %v2063, %v2063
      %v2066 = vunpack.c.l.s4 1966171168
      %v2067 = vunpack.c.0.s8 %v2066
      %v2068 = vlaneseq
      %v2069 = vshrl.u32 %v2068, 7
      %v2070 = vsub.s32 %v2067, %v2069
      %v2071 = vrot.slane %v2063, %v2070
      %v2073 = vunpack.c.l.s4 1966171168
      %v2074 = vunpack.c.0.s8 %v2073
      %v2075 = vlaneseq
      %v2076 = vshrl.u32 %v2075, 7
      %v2077 = vsub.s32 %v2074, %v2076
      %v2078 = vrot.slane %v2064, %v2077
      %v2079 = vcombine.high %v2071, %v2071
      %v2080 = vcombine.high %v2078, %v2078
      %v2081 = vlaneseq
      %v2082 = vshrl.u32 %v2081, 7
      %v2083 = vsub.s32 0, %v2082
      %v2084 = vrot.slane %v2071, %v2083
      %v2085 = vlaneseq
      %v2086 = vshrl.u32 %v2085, 7
      %v2087 = vsub.s32 1, %v2086
      %v2088 = vrot.slane %v2071, %v2087
      %v2089 = vlaneseq
      %v2090 = vshrl.u32 %v2089, 7
      %v2091 = vsub.s32 0, %v2090
      %v2092 = vrot.slane %v2078, %v2091
      %v2093 = vlaneseq
      %v2094 = vshrl.u32 %v2093, 7
      %v2095 = vsub.s32 1, %v2094
      %v2096 = vrot.slane %v2078, %v2095
      %v2097 = vlaneseq
      %v2098 = vshrl.u32 %v2097, 7
      %v2099 = vsub.s32 0, %v2098
      %v2100 = vrot.slane %v2079, %v2099
      %v2101 = vlaneseq
      %v2102 = vshrl.u32 %v2101, 7
      %v2103 = vsub.s32 1, %v2102
      %v2104 = vrot.slane %v2079, %v2103
      %v2105 = vlaneseq
      %v2106 = vshrl.u32 %v2105, 7
      %v2107 = vsub.s32 0, %v2106
      %v2108 = vrot.slane %v2080, %v2107
      %v2109 = vlaneseq
      %v2110 = vshrl.u32 %v2109, 7
      %v2111 = vsub.s32 1, %v2110
      %v2112 = vrot.slane %v2080, %v2111
      %v2121 = vmul.f32 %v1860, %v2084
      %v2122 = vmul.f32 %v1861, %v2088
      %v2123 = vmul.f32 %v1862, %v2092
      %v2124 = vmul.f32 %v1863, %v2096
      %v2125 = vmul.f32 %v1864, %v2100
      %v2126 = vmul.f32 %v1865, %v2104
      %v2127 = vmul.f32 %v1866, %v2108
      %v2128 = vmul.f32 %v1867, %v2112
      %v2131 = vcombine.low %v2052, %v2053
      %v2133 = vunpack.c.l.s4 1966171168
      %v2134 = vunpack.c.0.s8 %v2133
      %v2135 = vlaneseq
      %v2136 = vshrl.u32 %v2135, 7
      %v2137 = vsub.s32 %v2134, %v2136
      %v2138 = vrot.slane %v2131, %v2137
      %v2139 = vcombine.high %v2138, %v2138
      %v2141 = vunpack.c.l.s4 1966171168
      %v2142 = vunpack.c.0.s8 %v2141
      %v2143 = vlaneseq
      %v2144 = vshrl.u32 %v2143, 7
      %v2145 = vsub.s32 %v2142, %v2144
      %v2146 = vrot.slane %v2138, %v2145
      %v2148 = vunpack.c.l.s4 1966171168
      %v2149 = vunpack.c.0.s8 %v2148
      %v2150 = vlaneseq
      %v2151 = vshrl.u32 %v2150, 7
      %v2152 = vsub.s32 %v2149, %v2151
      %v2153 = vrot.slane %v2139, %v2152
      %v2154 = vcombine.high %v2146, %v2146
      %v2155 = vcombine.high %v2153, %v2153
      %v2156 = vlaneseq
      %v2157 = vshrl.u32 %v2156, 7
      %v2158 = vsub.s32 0, %v2157
      %v2159 = vrot.slane %v2146, %v2158
      %v2160 = vlaneseq
      %v2161 = vshrl.u32 %v2160, 7
      %v2162 = vsub.s32 1, %v2161
      %v2163 = vrot.slane %v2146, %v2162
      %v2164 = vlaneseq
      %v2165 = vshrl.u32 %v2164, 7
      %v2166 = vsub.s32 0, %v2165
      %v2167 = vrot.slane %v2153, %v2166
      %v2168 = vlaneseq
      %v2169 = vshrl.u32 %v2168, 7
      %v2170 = vsub.s32 1, %v2169
      %v2171 = vrot.slane %v2153, %v2170
      %v2172 = vlaneseq
      %v2173 = vshrl.u32 %v2172, 7
      %v2174 = vsub.s32 0, %v2173
      %v2175 = vrot.slane %v2154, %v2174
      %v2176 = vlaneseq
      %v2177 = vshrl.u32 %v2176, 7
      %v2178 = vsub.s32 1, %v2177
      %v2179 = vrot.slane %v2154, %v2178
      %v2180 = vlaneseq
      %v2181 = vshrl.u32 %v2180, 7
      %v2182 = vsub.s32 0, %v2181
      %v2183 = vrot.slane %v2155, %v2182
      %v2184 = vlaneseq
      %v2185 = vshrl.u32 %v2184, 7
      %v2186 = vsub.s32 1, %v2185
      %v2187 = vrot.slane %v2155, %v2186
      %v2196 = vmul.f32 %v2159, %v1909
      %v2197 = vmul.f32 %v2163, %v1913
      %v2198 = vmul.f32 %v2167, %v1910
      %v2199 = vmul.f32 %v2171, %v1914
      %v2200 = vmul.f32 %v2175, %v1911
      %v2201 = vmul.f32 %v2179, %v1915
      %v2202 = vmul.f32 %v2183, %v1912
      %v2203 = vmul.f32 %v2187, %v1916
      %v2204 = vadd.f32 %v2121, %v2196
      %v2205 = vadd.f32 %v2122, %v2197
      %v2206 = vadd.f32 %v2123, %v2198
      %v2207 = vadd.f32 %v2124, %v2199
      %v2208 = vadd.f32 %v2125, %v2200
      %v2209 = vadd.f32 %v2126, %v2201
      %v2210 = vadd.f32 %v2127, %v2202
      %v2211 = vadd.f32 %v2128, %v2203
      %2212 = vrot.lane.b32.xlu0 %v267, 113
      %v2213 = vpop.permute.xlu0 %2212
      %2214 = vrot.lane.b32.xlu0 %v268, 113
      %v2215 = vpop.permute.xlu0 %2214
      %2216 = vrot.lane.b32.xlu0 %v269, 113
      %v2217 = vpop.permute.xlu0 %2216
      %2218 = vrot.lane.b32.xlu0 %v270, 113
      %v2219 = vpop.permute.xlu0 %2218
      %2220 = vrot.lane.b32.xlu0 %v279, 113
      %v2221 = vpop.permute.xlu0 %2220
      %2222 = vrot.lane.b32.xlu0 %v280, 113
      %v2223 = vpop.permute.xlu0 %2222
      %2224 = vrot.lane.b32.xlu0 %v281, 113
      %v2225 = vpop.permute.xlu0 %2224
      %2226 = vrot.lane.b32.xlu0 %v282, 113
      %v2227 = vpop.permute.xlu0 %2226
      %vm2228 = vcmp.lt.s32.totalorder %v304, 113
      %v2229 = vsel %vm2228, %v2213, %v2221
      %v2230 = vsel %vm2228, %v2215, %v2223
      %v2231 = vsel %vm2228, %v2217, %v2225
      %v2232 = vsel %vm2228, %v2219, %v2227
      %v2233 = vsel %vm2228, %v2221, %v2213
      %v2234 = vsel %vm2228, %v2223, %v2215
      %v2235 = vsel %vm2228, %v2225, %v2217
      %v2236 = vsel %vm2228, %v2227, %v2219
      %2237 = vrot.lane.b32.xlu0 %v271, 113
      %v2238 = vpop.permute.xlu0 %2237
      %2239 = vrot.lane.b32.xlu0 %v272, 113
      %v2240 = vpop.permute.xlu0 %2239
      %2241 = vrot.lane.b32.xlu0 %v273, 113
      %v2242 = vpop.permute.xlu0 %2241
      %2243 = vrot.lane.b32.xlu0 %v274, 113
      %v2244 = vpop.permute.xlu0 %2243
      %2245 = vrot.lane.b32.xlu0 %v318, 113
      %v2246 = vpop.permute.xlu0 %2245
      %2247 = vrot.lane.b32.xlu0 %v319, 113
      %v2248 = vpop.permute.xlu0 %2247
      %2249 = vrot.lane.b32.xlu0 %v320, 113
      %v2250 = vpop.permute.xlu0 %2249
      %2251 = vrot.lane.b32.xlu0 %v321, 113
      %v2252 = vpop.permute.xlu0 %2251
      %v2253 = vsel %vm2228, %v2238, %v2246
      %v2254 = vsel %vm2228, %v2240, %v2248
      %v2255 = vsel %vm2228, %v2242, %v2250
      %v2256 = vsel %vm2228, %v2244, %v2252
      %v2257 = vsel %vm2228, %v2246, %v2238
      %v2258 = vsel %vm2228, %v2248, %v2240
      %v2259 = vsel %vm2228, %v2250, %v2242
      %v2260 = vsel %vm2228, %v2252, %v2244
      %vm2261 = vcmp.lt.s32.totalorder %v256, 15
      %vm2262 = vmand %vm2261, %vm351
      %v2271 = vcombine.low %v2229, %v2233
      %v2272 = vcombine.low %v2230, %v2234
      %v2273 = vcombine.low %v2231, %v2235
      %v2274 = vcombine.low %v2232, %v2236
      %v2279 = vmul.f32 %v263, %v2271
      %v2280 = vmul.f32 %v264, %v2272
      %v2281 = vmul.f32 %v265, %v2273
      %v2282 = vmul.f32 %v266, %v2274
      %v2287 = vcombine.high %v2279, %v2279
      %v2288 = vcombine.high %v2280, %v2280
      %v2289 = vcombine.high %v2281, %v2281
      %v2290 = vcombine.high %v2282, %v2282
      %v2295 = vsel %vm385, %v2279, 0.0
      %v2296 = vrot.slane %v2295, 4
      %v2297 = vadd.f32 %v2295, %v2296
      %v2298 = vrot.slane %v2297, 2
      %v2299 = vadd.f32 %v2297, %v2298
      %v2300 = vrot.slane %v2299, 1
      %v2301 = vadd.f32 %v2299, %v2300
      %v2302 = vsel %vm385, %v2287, 0.0
      %v2303 = vrot.slane %v2302, 4
      %v2304 = vadd.f32 %v2302, %v2303
      %v2305 = vrot.slane %v2304, 2
      %v2306 = vadd.f32 %v2304, %v2305
      %v2307 = vrot.slane %v2306, 1
      %v2308 = vadd.f32 %v2306, %v2307
      %v2309 = vsel %vm385, %v2280, 0.0
      %v2310 = vrot.slane %v2309, 4
      %v2311 = vadd.f32 %v2309, %v2310
      %v2312 = vrot.slane %v2311, 2
      %v2313 = vadd.f32 %v2311, %v2312
      %v2314 = vrot.slane %v2313, 1
      %v2315 = vadd.f32 %v2313, %v2314
      %v2316 = vsel %vm385, %v2288, 0.0
      %v2317 = vrot.slane %v2316, 4
      %v2318 = vadd.f32 %v2316, %v2317
      %v2319 = vrot.slane %v2318, 2
      %v2320 = vadd.f32 %v2318, %v2319
      %v2321 = vrot.slane %v2320, 1
      %v2322 = vadd.f32 %v2320, %v2321
      %v2323 = vsel %vm385, %v2281, 0.0
      %v2324 = vrot.slane %v2323, 4
      %v2325 = vadd.f32 %v2323, %v2324
      %v2326 = vrot.slane %v2325, 2
      %v2327 = vadd.f32 %v2325, %v2326
      %v2328 = vrot.slane %v2327, 1
      %v2329 = vadd.f32 %v2327, %v2328
      %v2330 = vsel %vm385, %v2289, 0.0
      %v2331 = vrot.slane %v2330, 4
      %v2332 = vadd.f32 %v2330, %v2331
      %v2333 = vrot.slane %v2332, 2
      %v2334 = vadd.f32 %v2332, %v2333
      %v2335 = vrot.slane %v2334, 1
      %v2336 = vadd.f32 %v2334, %v2335
      %v2337 = vsel %vm385, %v2282, 0.0
      %v2338 = vrot.slane %v2337, 4
      %v2339 = vadd.f32 %v2337, %v2338
      %v2340 = vrot.slane %v2339, 2
      %v2341 = vadd.f32 %v2339, %v2340
      %v2342 = vrot.slane %v2341, 1
      %v2343 = vadd.f32 %v2341, %v2342
      %v2344 = vsel %vm385, %v2290, 0.0
      %v2345 = vrot.slane %v2344, 4
      %v2346 = vadd.f32 %v2344, %v2345
      %v2347 = vrot.slane %v2346, 2
      %v2348 = vadd.f32 %v2346, %v2347
      %v2349 = vrot.slane %v2348, 1
      %v2350 = vadd.f32 %v2348, %v2349
      %v2351 = vsel %vm2262, 1, 0
      %v2352 = vlaneseq
      %v2353 = vshrl.u32 %v2352, 7
      %v2354 = vsub.s32 0, %v2353
      %v2355 = vrot.slane %v2351, %v2354
      %v2356 = vlaneseq
      %v2357 = vshrl.u32 %v2356, 7
      %v2358 = vsub.s32 1, %v2357
      %v2359 = vrot.slane %v2351, %v2358
      %vm2360 = vcmp.eq.s32.totalorder %v2355, 1
      %vm2361 = vcmp.eq.s32.totalorder %v2359, 1
      %v2370 = vsel %vm461, %v2315, %v2301
      %v2371 = vsel %vm463, %v2329, %v2370
      %v2372 = vsel %vm465, %v2343, %v2371
      %v2373 = vsel %vm461, %v2322, %v2308
      %v2374 = vsel %vm463, %v2336, %v2373
      %v2375 = vsel %vm465, %v2350, %v2374
      %v2378 = vsel %vm2360, %v2372, 0.0
      %v2379 = vsel %vm2361, %v2375, 0.0
      %v2380 = vmax.f32 %v2034, %v2378
      %v2381 = vmax.f32 %v2035, %v2379
      %v2382 = vsub.f32 %v2034, %v2380
      %v2383 = vsub.f32 %v2035, %v2381
      %v2384 = vmul.f32 %v2382, 1.442695
      %v2385 = vpow.pop %v2384
      %v2386 = vmul.f32 %v2383, 1.442695
      %v2387 = vpow.pop %v2386
      %v2388 = vsub.f32 %v2378, %v2380
      %v2389 = vsub.f32 %v2379, %v2381
      %v2390 = vmul.f32 %v2388, 1.442695
      %v2391 = vpow.pop %v2390
      %v2392 = vmul.f32 %v2389, 1.442695
      %v2393 = vpow.pop %v2392
      %v2394 = vmul.f32 %v2385, %v2050
      %v2395 = vmul.f32 %v2387, %v2051
      %v2396 = vadd.f32 %v2394, %v2391
      %v2397 = vadd.f32 %v2395, %v2393
      %v2398 = vsel %vm2360, %v2391, 0.0
      %v2399 = vsel %vm2361, %v2393, 0.0
      %v2402 = vcombine.low %v2385, %v2387
      %v2404 = vunpack.c.l.s4 1966171168
      %v2405 = vunpack.c.0.s8 %v2404
      %v2406 = vlaneseq
      %v2407 = vshrl.u32 %v2406, 7
      %v2408 = vsub.s32 %v2405, %v2407
      %v2409 = vrot.slane %v2402, %v2408
      %v2410 = vcombine.high %v2409, %v2409
      %v2412 = vunpack.c.l.s4 1966171168
      %v2413 = vunpack.c.0.s8 %v2412
      %v2414 = vlaneseq
      %v2415 = vshrl.u32 %v2414, 7
      %v2416 = vsub.s32 %v2413, %v2415
      %v2417 = vrot.slane %v2409, %v2416
      %v2419 = vunpack.c.l.s4 1966171168
      %v2420 = vunpack.c.0.s8 %v2419
      %v2421 = vlaneseq
      %v2422 = vshrl.u32 %v2421, 7
      %v2423 = vsub.s32 %v2420, %v2422
      %v2424 = vrot.slane %v2410, %v2423
      %v2425 = vcombine.high %v2417, %v2417
      %v2426 = vcombine.high %v2424, %v2424
      %v2427 = vlaneseq
      %v2428 = vshrl.u32 %v2427, 7
      %v2429 = vsub.s32 0, %v2428
      %v2430 = vrot.slane %v2417, %v2429
      %v2431 = vlaneseq
      %v2432 = vshrl.u32 %v2431, 7
      %v2433 = vsub.s32 1, %v2432
      %v2434 = vrot.slane %v2417, %v2433
      %v2435 = vlaneseq
      %v2436 = vshrl.u32 %v2435, 7
      %v2437 = vsub.s32 0, %v2436
      %v2438 = vrot.slane %v2424, %v2437
      %v2439 = vlaneseq
      %v2440 = vshrl.u32 %v2439, 7
      %v2441 = vsub.s32 1, %v2440
      %v2442 = vrot.slane %v2424, %v2441
      %v2443 = vlaneseq
      %v2444 = vshrl.u32 %v2443, 7
      %v2445 = vsub.s32 0, %v2444
      %v2446 = vrot.slane %v2425, %v2445
      %v2447 = vlaneseq
      %v2448 = vshrl.u32 %v2447, 7
      %v2449 = vsub.s32 1, %v2448
      %v2450 = vrot.slane %v2425, %v2449
      %v2451 = vlaneseq
      %v2452 = vshrl.u32 %v2451, 7
      %v2453 = vsub.s32 0, %v2452
      %v2454 = vrot.slane %v2426, %v2453
      %v2455 = vlaneseq
      %v2456 = vshrl.u32 %v2455, 7
      %v2457 = vsub.s32 1, %v2456
      %v2458 = vrot.slane %v2426, %v2457
      %v2467 = vmul.f32 %v2204, %v2430
      %v2468 = vmul.f32 %v2205, %v2434
      %v2469 = vmul.f32 %v2206, %v2438
      %v2470 = vmul.f32 %v2207, %v2442
      %v2471 = vmul.f32 %v2208, %v2446
      %v2472 = vmul.f32 %v2209, %v2450
      %v2473 = vmul.f32 %v2210, %v2454
      %v2474 = vmul.f32 %v2211, %v2458
      %v2477 = vcombine.low %v2398, %v2399
      %v2479 = vunpack.c.l.s4 1966171168
      %v2480 = vunpack.c.0.s8 %v2479
      %v2481 = vlaneseq
      %v2482 = vshrl.u32 %v2481, 7
      %v2483 = vsub.s32 %v2480, %v2482
      %v2484 = vrot.slane %v2477, %v2483
      %v2485 = vcombine.high %v2484, %v2484
      %v2487 = vunpack.c.l.s4 1966171168
      %v2488 = vunpack.c.0.s8 %v2487
      %v2489 = vlaneseq
      %v2490 = vshrl.u32 %v2489, 7
      %v2491 = vsub.s32 %v2488, %v2490
      %v2492 = vrot.slane %v2484, %v2491
      %v2494 = vunpack.c.l.s4 1966171168
      %v2495 = vunpack.c.0.s8 %v2494
      %v2496 = vlaneseq
      %v2497 = vshrl.u32 %v2496, 7
      %v2498 = vsub.s32 %v2495, %v2497
      %v2499 = vrot.slane %v2485, %v2498
      %v2500 = vcombine.high %v2492, %v2492
      %v2501 = vcombine.high %v2499, %v2499
      %v2502 = vlaneseq
      %v2503 = vshrl.u32 %v2502, 7
      %v2504 = vsub.s32 0, %v2503
      %v2505 = vrot.slane %v2492, %v2504
      %v2506 = vlaneseq
      %v2507 = vshrl.u32 %v2506, 7
      %v2508 = vsub.s32 1, %v2507
      %v2509 = vrot.slane %v2492, %v2508
      %v2510 = vlaneseq
      %v2511 = vshrl.u32 %v2510, 7
      %v2512 = vsub.s32 0, %v2511
      %v2513 = vrot.slane %v2499, %v2512
      %v2514 = vlaneseq
      %v2515 = vshrl.u32 %v2514, 7
      %v2516 = vsub.s32 1, %v2515
      %v2517 = vrot.slane %v2499, %v2516
      %v2518 = vlaneseq
      %v2519 = vshrl.u32 %v2518, 7
      %v2520 = vsub.s32 0, %v2519
      %v2521 = vrot.slane %v2500, %v2520
      %v2522 = vlaneseq
      %v2523 = vshrl.u32 %v2522, 7
      %v2524 = vsub.s32 1, %v2523
      %v2525 = vrot.slane %v2500, %v2524
      %v2526 = vlaneseq
      %v2527 = vshrl.u32 %v2526, 7
      %v2528 = vsub.s32 0, %v2527
      %v2529 = vrot.slane %v2501, %v2528
      %v2530 = vlaneseq
      %v2531 = vshrl.u32 %v2530, 7
      %v2532 = vsub.s32 1, %v2531
      %v2533 = vrot.slane %v2501, %v2532
      %v2542 = vmul.f32 %v2505, %v2253
      %v2543 = vmul.f32 %v2509, %v2257
      %v2544 = vmul.f32 %v2513, %v2254
      %v2545 = vmul.f32 %v2517, %v2258
      %v2546 = vmul.f32 %v2521, %v2255
      %v2547 = vmul.f32 %v2525, %v2259
      %v2548 = vmul.f32 %v2529, %v2256
      %v2549 = vmul.f32 %v2533, %v2260
      %v2550 = vadd.f32 %v2467, %v2542
      %v2551 = vadd.f32 %v2468, %v2543
      %v2552 = vadd.f32 %v2469, %v2544
      %v2553 = vadd.f32 %v2470, %v2545
      %v2554 = vadd.f32 %v2471, %v2546
      %v2555 = vadd.f32 %v2472, %v2547
      %v2556 = vadd.f32 %v2473, %v2548
      %v2557 = vadd.f32 %v2474, %v2549
      %2558 = vrot.lane.b32.xlu0 %v267, 112
      %v2559 = vpop.permute.xlu0 %2558
      %2560 = vrot.lane.b32.xlu0 %v268, 112
      %v2561 = vpop.permute.xlu0 %2560
      %2562 = vrot.lane.b32.xlu0 %v269, 112
      %v2563 = vpop.permute.xlu0 %2562
      %2564 = vrot.lane.b32.xlu0 %v270, 112
      %v2565 = vpop.permute.xlu0 %2564
      %2566 = vrot.lane.b32.xlu0 %v279, 112
      %v2567 = vpop.permute.xlu0 %2566
      %2568 = vrot.lane.b32.xlu0 %v280, 112
      %v2569 = vpop.permute.xlu0 %2568
      %2570 = vrot.lane.b32.xlu0 %v281, 112
      %v2571 = vpop.permute.xlu0 %2570
      %2572 = vrot.lane.b32.xlu0 %v282, 112
      %v2573 = vpop.permute.xlu0 %2572
      %vm2574 = vcmp.lt.s32.totalorder %v304, 112
      %v2575 = vsel %vm2574, %v2559, %v2567
      %v2576 = vsel %vm2574, %v2561, %v2569
      %v2577 = vsel %vm2574, %v2563, %v2571
      %v2578 = vsel %vm2574, %v2565, %v2573
      %v2579 = vsel %vm2574, %v2567, %v2559
      %v2580 = vsel %vm2574, %v2569, %v2561
      %v2581 = vsel %vm2574, %v2571, %v2563
      %v2582 = vsel %vm2574, %v2573, %v2565
      %2583 = vrot.lane.b32.xlu0 %v271, 112
      %v2584 = vpop.permute.xlu0 %2583
      %2585 = vrot.lane.b32.xlu0 %v272, 112
      %v2586 = vpop.permute.xlu0 %2585
      %2587 = vrot.lane.b32.xlu0 %v273, 112
      %v2588 = vpop.permute.xlu0 %2587
      %2589 = vrot.lane.b32.xlu0 %v274, 112
      %v2590 = vpop.permute.xlu0 %2589
      %2591 = vrot.lane.b32.xlu0 %v318, 112
      %v2592 = vpop.permute.xlu0 %2591
      %2593 = vrot.lane.b32.xlu0 %v319, 112
      %v2594 = vpop.permute.xlu0 %2593
      %2595 = vrot.lane.b32.xlu0 %v320, 112
      %v2596 = vpop.permute.xlu0 %2595
      %2597 = vrot.lane.b32.xlu0 %v321, 112
      %v2598 = vpop.permute.xlu0 %2597
      %v2599 = vsel %vm2574, %v2584, %v2592
      %v2600 = vsel %vm2574, %v2586, %v2594
      %v2601 = vsel %vm2574, %v2588, %v2596
      %v2602 = vsel %vm2574, %v2590, %v2598
      %v2603 = vsel %vm2574, %v2592, %v2584
      %v2604 = vsel %vm2574, %v2594, %v2586
      %v2605 = vsel %vm2574, %v2596, %v2588
      %v2606 = vsel %vm2574, %v2598, %v2590
      %v2615 = vcombine.low %v2575, %v2579
      %v2616 = vcombine.low %v2576, %v2580
      %v2617 = vcombine.low %v2577, %v2581
      %v2618 = vcombine.low %v2578, %v2582
      %v2623 = vmul.f32 %v263, %v2615
      %v2624 = vmul.f32 %v264, %v2616
      %v2625 = vmul.f32 %v265, %v2617
      %v2626 = vmul.f32 %v266, %v2618
      %v2631 = vcombine.high %v2623, %v2623
      %v2632 = vcombine.high %v2624, %v2624
      %v2633 = vcombine.high %v2625, %v2625
      %v2634 = vcombine.high %v2626, %v2626
      %v2639 = vsel %vm385, %v2623, 0.0
      %v2640 = vrot.slane %v2639, 4
      %v2641 = vadd.f32 %v2639, %v2640
      %v2642 = vrot.slane %v2641, 2
      %v2643 = vadd.f32 %v2641, %v2642
      %v2644 = vrot.slane %v2643, 1
      %v2645 = vadd.f32 %v2643, %v2644
      %v2646 = vsel %vm385, %v2631, 0.0
      %v2647 = vrot.slane %v2646, 4
      %v2648 = vadd.f32 %v2646, %v2647
      %v2649 = vrot.slane %v2648, 2
      %v2650 = vadd.f32 %v2648, %v2649
      %v2651 = vrot.slane %v2650, 1
      %v2652 = vadd.f32 %v2650, %v2651
      %v2653 = vsel %vm385, %v2624, 0.0
      %v2654 = vrot.slane %v2653, 4
      %v2655 = vadd.f32 %v2653, %v2654
      %v2656 = vrot.slane %v2655, 2
      %v2657 = vadd.f32 %v2655, %v2656
      %v2658 = vrot.slane %v2657, 1
      %v2659 = vadd.f32 %v2657, %v2658
      %v2660 = vsel %vm385, %v2632, 0.0
      %v2661 = vrot.slane %v2660, 4
      %v2662 = vadd.f32 %v2660, %v2661
      %v2663 = vrot.slane %v2662, 2
      %v2664 = vadd.f32 %v2662, %v2663
      %v2665 = vrot.slane %v2664, 1
      %v2666 = vadd.f32 %v2664, %v2665
      %v2667 = vsel %vm385, %v2625, 0.0
      %v2668 = vrot.slane %v2667, 4
      %v2669 = vadd.f32 %v2667, %v2668
      %v2670 = vrot.slane %v2669, 2
      %v2671 = vadd.f32 %v2669, %v2670
      %v2672 = vrot.slane %v2671, 1
      %v2673 = vadd.f32 %v2671, %v2672
      %v2674 = vsel %vm385, %v2633, 0.0
      %v2675 = vrot.slane %v2674, 4
      %v2676 = vadd.f32 %v2674, %v2675
      %v2677 = vrot.slane %v2676, 2
      %v2678 = vadd.f32 %v2676, %v2677
      %v2679 = vrot.slane %v2678, 1
      %v2680 = vadd.f32 %v2678, %v2679
      %v2681 = vsel %vm385, %v2626, 0.0
      %v2682 = vrot.slane %v2681, 4
      %v2683 = vadd.f32 %v2681, %v2682
      %v2684 = vrot.slane %v2683, 2
      %v2685 = vadd.f32 %v2683, %v2684
      %v2686 = vrot.slane %v2685, 1
      %v2687 = vadd.f32 %v2685, %v2686
      %v2688 = vsel %vm385, %v2634, 0.0
      %v2689 = vrot.slane %v2688, 4
      %v2690 = vadd.f32 %v2688, %v2689
      %v2691 = vrot.slane %v2690, 2
      %v2692 = vadd.f32 %v2690, %v2691
      %v2693 = vrot.slane %v2692, 1
      %v2694 = vadd.f32 %v2692, %v2693
      %v2695 = vsel %vm2261, 1, 0
      %v2696 = vlaneseq
      %v2697 = vshrl.u32 %v2696, 7
      %v2698 = vsub.s32 0, %v2697
      %v2699 = vrot.slane %v2695, %v2698
      %v2700 = vlaneseq
      %v2701 = vshrl.u32 %v2700, 7
      %v2702 = vsub.s32 1, %v2701
      %v2703 = vrot.slane %v2695, %v2702
      %vm2704 = vcmp.eq.s32.totalorder %v2699, 1
      %vm2705 = vcmp.eq.s32.totalorder %v2703, 1
      %v2714 = vsel %vm461, %v2659, %v2645
      %v2715 = vsel %vm463, %v2673, %v2714
      %v2716 = vsel %vm465, %v2687, %v2715
      %v2717 = vsel %vm461, %v2666, %v2652
      %v2718 = vsel %vm463, %v2680, %v2717
      %v2719 = vsel %vm465, %v2694, %v2718
      %v2722 = vsel %vm2704, %v2716, 0.0
      %v2723 = vsel %vm2705, %v2719, 0.0
      %v2724 = vmax.f32 %v2380, %v2722
      %v2725 = vmax.f32 %v2381, %v2723
      %v2726 = vsub.f32 %v2380, %v2724
      %v2727 = vsub.f32 %v2381, %v2725
      %v2728 = vmul.f32 %v2726, 1.442695
      %v2729 = vpow.pop %v2728
      %v2730 = vmul.f32 %v2727, 1.442695
      %v2731 = vpow.pop %v2730
      %v2732 = vsub.f32 %v2722, %v2724
      %v2733 = vsub.f32 %v2723, %v2725
      %v2734 = vmul.f32 %v2732, 1.442695
      %v2735 = vpow.pop %v2734
      %v2736 = vmul.f32 %v2733, 1.442695
      %v2737 = vpow.pop %v2736
      %v2738 = vmul.f32 %v2729, %v2396
      %v2739 = vmul.f32 %v2731, %v2397
      %v2740 = vadd.f32 %v2738, %v2735
      %v2741 = vadd.f32 %v2739, %v2737
      %v2742 = vsel %vm2704, %v2735, 0.0
      %v2743 = vsel %vm2705, %v2737, 0.0
      %v2746 = vcombine.low %v2729, %v2731
      %v2748 = vunpack.c.l.s4 1966171168
      %v2749 = vunpack.c.0.s8 %v2748
      %v2750 = vlaneseq
      %v2751 = vshrl.u32 %v2750, 7
      %v2752 = vsub.s32 %v2749, %v2751
      %v2753 = vrot.slane %v2746, %v2752
      %v2754 = vcombine.high %v2753, %v2753
      %v2756 = vunpack.c.l.s4 1966171168
      %v2757 = vunpack.c.0.s8 %v2756
      %v2758 = vlaneseq
      %v2759 = vshrl.u32 %v2758, 7
      %v2760 = vsub.s32 %v2757, %v2759
      %v2761 = vrot.slane %v2753, %v2760
      %v2763 = vunpack.c.l.s4 1966171168
      %v2764 = vunpack.c.0.s8 %v2763
      %v2765 = vlaneseq
      %v2766 = vshrl.u32 %v2765, 7
      %v2767 = vsub.s32 %v2764, %v2766
      %v2768 = vrot.slane %v2754, %v2767
      %v2769 = vcombine.high %v2761, %v2761
      %v2770 = vcombine.high %v2768, %v2768
      %v2771 = vlaneseq
      %v2772 = vshrl.u32 %v2771, 7
      %v2773 = vsub.s32 0, %v2772
      %v2774 = vrot.slane %v2761, %v2773
      %v2775 = vlaneseq
      %v2776 = vshrl.u32 %v2775, 7
      %v2777 = vsub.s32 1, %v2776
      %v2778 = vrot.slane %v2761, %v2777
      %v2779 = vlaneseq
      %v2780 = vshrl.u32 %v2779, 7
      %v2781 = vsub.s32 0, %v2780
      %v2782 = vrot.slane %v2768, %v2781
      %v2783 = vlaneseq
      %v2784 = vshrl.u32 %v2783, 7
      %v2785 = vsub.s32 1, %v2784
      %v2786 = vrot.slane %v2768, %v2785
      %v2787 = vlaneseq
      %v2788 = vshrl.u32 %v2787, 7
      %v2789 = vsub.s32 0, %v2788
      %v2790 = vrot.slane %v2769, %v2789
      %v2791 = vlaneseq
      %v2792 = vshrl.u32 %v2791, 7
      %v2793 = vsub.s32 1, %v2792
      %v2794 = vrot.slane %v2769, %v2793
      %v2795 = vlaneseq
      %v2796 = vshrl.u32 %v2795, 7
      %v2797 = vsub.s32 0, %v2796
      %v2798 = vrot.slane %v2770, %v2797
      %v2799 = vlaneseq
      %v2800 = vshrl.u32 %v2799, 7
      %v2801 = vsub.s32 1, %v2800
      %v2802 = vrot.slane %v2770, %v2801
      %v2811 = vmul.f32 %v2550, %v2774
      %v2812 = vmul.f32 %v2551, %v2778
      %v2813 = vmul.f32 %v2552, %v2782
      %v2814 = vmul.f32 %v2553, %v2786
      %v2815 = vmul.f32 %v2554, %v2790
      %v2816 = vmul.f32 %v2555, %v2794
      %v2817 = vmul.f32 %v2556, %v2798
      %v2818 = vmul.f32 %v2557, %v2802
      %v2821 = vcombine.low %v2742, %v2743
      %v2823 = vunpack.c.l.s4 1966171168
      %v2824 = vunpack.c.0.s8 %v2823
      %v2825 = vlaneseq
      %v2826 = vshrl.u32 %v2825, 7
      %v2827 = vsub.s32 %v2824, %v2826
      %v2828 = vrot.slane %v2821, %v2827
      %v2829 = vcombine.high %v2828, %v2828
      %v2831 = vunpack.c.l.s4 1966171168
      %v2832 = vunpack.c.0.s8 %v2831
      %v2833 = vlaneseq
      %v2834 = vshrl.u32 %v2833, 7
      %v2835 = vsub.s32 %v2832, %v2834
      %v2836 = vrot.slane %v2828, %v2835
      %v2838 = vunpack.c.l.s4 1966171168
      %v2839 = vunpack.c.0.s8 %v2838
      %v2840 = vlaneseq
      %v2841 = vshrl.u32 %v2840, 7
      %v2842 = vsub.s32 %v2839, %v2841
      %v2843 = vrot.slane %v2829, %v2842
      %v2844 = vcombine.high %v2836, %v2836
      %v2845 = vcombine.high %v2843, %v2843
      %v2846 = vlaneseq
      %v2847 = vshrl.u32 %v2846, 7
      %v2848 = vsub.s32 0, %v2847
      %v2849 = vrot.slane %v2836, %v2848
      %v2850 = vlaneseq
      %v2851 = vshrl.u32 %v2850, 7
      %v2852 = vsub.s32 1, %v2851
      %v2853 = vrot.slane %v2836, %v2852
      %v2854 = vlaneseq
      %v2855 = vshrl.u32 %v2854, 7
      %v2856 = vsub.s32 0, %v2855
      %v2857 = vrot.slane %v2843, %v2856
      %v2858 = vlaneseq
      %v2859 = vshrl.u32 %v2858, 7
      %v2860 = vsub.s32 1, %v2859
      %v2861 = vrot.slane %v2843, %v2860
      %v2862 = vlaneseq
      %v2863 = vshrl.u32 %v2862, 7
      %v2864 = vsub.s32 0, %v2863
      %v2865 = vrot.slane %v2844, %v2864
      %v2866 = vlaneseq
      %v2867 = vshrl.u32 %v2866, 7
      %v2868 = vsub.s32 1, %v2867
      %v2869 = vrot.slane %v2844, %v2868
      %v2870 = vlaneseq
      %v2871 = vshrl.u32 %v2870, 7
      %v2872 = vsub.s32 0, %v2871
      %v2873 = vrot.slane %v2845, %v2872
      %v2874 = vlaneseq
      %v2875 = vshrl.u32 %v2874, 7
      %v2876 = vsub.s32 1, %v2875
      %v2877 = vrot.slane %v2845, %v2876
      %v2886 = vmul.f32 %v2849, %v2599
      %v2887 = vmul.f32 %v2853, %v2603
      %v2888 = vmul.f32 %v2857, %v2600
      %v2889 = vmul.f32 %v2861, %v2604
      %v2890 = vmul.f32 %v2865, %v2601
      %v2891 = vmul.f32 %v2869, %v2605
      %v2892 = vmul.f32 %v2873, %v2602
      %v2893 = vmul.f32 %v2877, %v2606
      %v2894 = vadd.f32 %v2811, %v2886
      %v2895 = vadd.f32 %v2812, %v2887
      %v2896 = vadd.f32 %v2813, %v2888
      %v2897 = vadd.f32 %v2814, %v2889
      %v2898 = vadd.f32 %v2815, %v2890
      %v2899 = vadd.f32 %v2816, %v2891
      %v2900 = vadd.f32 %v2817, %v2892
      %v2901 = vadd.f32 %v2818, %v2893
      %2902 = vrot.lane.b32.xlu0 %v267, 111
      %v2903 = vpop.permute.xlu0 %2902
      %2904 = vrot.lane.b32.xlu0 %v268, 111
      %v2905 = vpop.permute.xlu0 %2904
      %2906 = vrot.lane.b32.xlu0 %v269, 111
      %v2907 = vpop.permute.xlu0 %2906
      %2908 = vrot.lane.b32.xlu0 %v270, 111
      %v2909 = vpop.permute.xlu0 %2908
      %2910 = vrot.lane.b32.xlu0 %v279, 111
      %v2911 = vpop.permute.xlu0 %2910
      %2912 = vrot.lane.b32.xlu0 %v280, 111
      %v2913 = vpop.permute.xlu0 %2912
      %2914 = vrot.lane.b32.xlu0 %v281, 111
      %v2915 = vpop.permute.xlu0 %2914
      %2916 = vrot.lane.b32.xlu0 %v282, 111
      %v2917 = vpop.permute.xlu0 %2916
      %vm2918 = vcmp.lt.s32.totalorder %v304, 111
      %v2919 = vsel %vm2918, %v2903, %v2911
      %v2920 = vsel %vm2918, %v2905, %v2913
      %v2921 = vsel %vm2918, %v2907, %v2915
      %v2922 = vsel %vm2918, %v2909, %v2917
      %v2923 = vsel %vm2918, %v2911, %v2903
      %v2924 = vsel %vm2918, %v2913, %v2905
      %v2925 = vsel %vm2918, %v2915, %v2907
      %v2926 = vsel %vm2918, %v2917, %v2909
      %2927 = vrot.lane.b32.xlu0 %v271, 111
      %v2928 = vpop.permute.xlu0 %2927
      %2929 = vrot.lane.b32.xlu0 %v272, 111
      %v2930 = vpop.permute.xlu0 %2929
      %2931 = vrot.lane.b32.xlu0 %v273, 111
      %v2932 = vpop.permute.xlu0 %2931
      %2933 = vrot.lane.b32.xlu0 %v274, 111
      %v2934 = vpop.permute.xlu0 %2933
      %2935 = vrot.lane.b32.xlu0 %v318, 111
      %v2936 = vpop.permute.xlu0 %2935
      %2937 = vrot.lane.b32.xlu0 %v319, 111
      %v2938 = vpop.permute.xlu0 %2937
      %2939 = vrot.lane.b32.xlu0 %v320, 111
      %v2940 = vpop.permute.xlu0 %2939
      %2941 = vrot.lane.b32.xlu0 %v321, 111
      %v2942 = vpop.permute.xlu0 %2941
      %v2943 = vsel %vm2918, %v2928, %v2936
      %v2944 = vsel %vm2918, %v2930, %v2938
      %v2945 = vsel %vm2918, %v2932, %v2940
      %v2946 = vsel %vm2918, %v2934, %v2942
      %v2947 = vsel %vm2918, %v2936, %v2928
      %v2948 = vsel %vm2918, %v2938, %v2930
      %v2949 = vsel %vm2918, %v2940, %v2932
      %v2950 = vsel %vm2918, %v2942, %v2934
      %vm2951 = vmand %vm2261, %vm942
      %v2960 = vcombine.low %v2919, %v2923
      %v2961 = vcombine.low %v2920, %v2924
      %v2962 = vcombine.low %v2921, %v2925
      %v2963 = vcombine.low %v2922, %v2926
      %v2968 = vmul.f32 %v263, %v2960
      %v2969 = vmul.f32 %v264, %v2961
      %v2970 = vmul.f32 %v265, %v2962
      %v2971 = vmul.f32 %v266, %v2963
      %v2976 = vcombine.high %v2968, %v2968
      %v2977 = vcombine.high %v2969, %v2969
      %v2978 = vcombine.high %v2970, %v2970
      %v2979 = vcombine.high %v2971, %v2971
      %v2984 = vsel %vm385, %v2968, 0.0
      %v2985 = vrot.slane %v2984, 4
      %v2986 = vadd.f32 %v2984, %v2985
      %v2987 = vrot.slane %v2986, 2
      %v2988 = vadd.f32 %v2986, %v2987
      %v2989 = vrot.slane %v2988, 1
      %v2990 = vadd.f32 %v2988, %v2989
      %v2991 = vsel %vm385, %v2976, 0.0
      %v2992 = vrot.slane %v2991, 4
      %v2993 = vadd.f32 %v2991, %v2992
      %v2994 = vrot.slane %v2993, 2
      %v2995 = vadd.f32 %v2993, %v2994
      %v2996 = vrot.slane %v2995, 1
      %v2997 = vadd.f32 %v2995, %v2996
      %v2998 = vsel %vm385, %v2969, 0.0
      %v2999 = vrot.slane %v2998, 4
      %v3000 = vadd.f32 %v2998, %v2999
      %v3001 = vrot.slane %v3000, 2
      %v3002 = vadd.f32 %v3000, %v3001
      %v3003 = vrot.slane %v3002, 1
      %v3004 = vadd.f32 %v3002, %v3003
      %v3005 = vsel %vm385, %v2977, 0.0
      %v3006 = vrot.slane %v3005, 4
      %v3007 = vadd.f32 %v3005, %v3006
      %v3008 = vrot.slane %v3007, 2
      %v3009 = vadd.f32 %v3007, %v3008
      %v3010 = vrot.slane %v3009, 1
      %v3011 = vadd.f32 %v3009, %v3010
      %v3012 = vsel %vm385, %v2970, 0.0
      %v3013 = vrot.slane %v3012, 4
      %v3014 = vadd.f32 %v3012, %v3013
      %v3015 = vrot.slane %v3014, 2
      %v3016 = vadd.f32 %v3014, %v3015
      %v3017 = vrot.slane %v3016, 1
      %v3018 = vadd.f32 %v3016, %v3017
      %v3019 = vsel %vm385, %v2978, 0.0
      %v3020 = vrot.slane %v3019, 4
      %v3021 = vadd.f32 %v3019, %v3020
      %v3022 = vrot.slane %v3021, 2
      %v3023 = vadd.f32 %v3021, %v3022
      %v3024 = vrot.slane %v3023, 1
      %v3025 = vadd.f32 %v3023, %v3024
      %v3026 = vsel %vm385, %v2971, 0.0
      %v3027 = vrot.slane %v3026, 4
      %v3028 = vadd.f32 %v3026, %v3027
      %v3029 = vrot.slane %v3028, 2
      %v3030 = vadd.f32 %v3028, %v3029
      %v3031 = vrot.slane %v3030, 1
      %v3032 = vadd.f32 %v3030, %v3031
      %v3033 = vsel %vm385, %v2979, 0.0
      %v3034 = vrot.slane %v3033, 4
      %v3035 = vadd.f32 %v3033, %v3034
      %v3036 = vrot.slane %v3035, 2
      %v3037 = vadd.f32 %v3035, %v3036
      %v3038 = vrot.slane %v3037, 1
      %v3039 = vadd.f32 %v3037, %v3038
      %v3040 = vsel %vm2951, 1, 0
      %v3041 = vlaneseq
      %v3042 = vshrl.u32 %v3041, 7
      %v3043 = vsub.s32 0, %v3042
      %v3044 = vrot.slane %v3040, %v3043
      %v3045 = vlaneseq
      %v3046 = vshrl.u32 %v3045, 7
      %v3047 = vsub.s32 1, %v3046
      %v3048 = vrot.slane %v3040, %v3047
      %vm3049 = vcmp.eq.s32.totalorder %v3044, 1
      %vm3050 = vcmp.eq.s32.totalorder %v3048, 1
      %v3059 = vsel %vm461, %v3004, %v2990
      %v3060 = vsel %vm463, %v3018, %v3059
      %v3061 = vsel %vm465, %v3032, %v3060
      %v3062 = vsel %vm461, %v3011, %v2997
      %v3063 = vsel %vm463, %v3025, %v3062
      %v3064 = vsel %vm465, %v3039, %v3063
      %v3067 = vsel %vm3049, %v3061, 0.0
      %v3068 = vsel %vm3050, %v3064, 0.0
      %v3069 = vmax.f32 %v2724, %v3067
      %v3070 = vmax.f32 %v2725, %v3068
      %v3071 = vsub.f32 %v2724, %v3069
      %v3072 = vsub.f32 %v2725, %v3070
      %v3073 = vmul.f32 %v3071, 1.442695
      %v3074 = vpow.pop %v3073
      %v3075 = vmul.f32 %v3072, 1.442695
      %v3076 = vpow.pop %v3075
      %v3077 = vsub.f32 %v3067, %v3069
      %v3078 = vsub.f32 %v3068, %v3070
      %v3079 = vmul.f32 %v3077, 1.442695
      %v3080 = vpow.pop %v3079
      %v3081 = vmul.f32 %v3078, 1.442695
      %v3082 = vpow.pop %v3081
      %v3083 = vmul.f32 %v3074, %v2740
      %v3084 = vmul.f32 %v3076, %v2741
      %v3085 = vadd.f32 %v3083, %v3080
      %v3086 = vadd.f32 %v3084, %v3082
      %v3087 = vsel %vm3049, %v3080, 0.0
      %v3088 = vsel %vm3050, %v3082, 0.0
      %v3091 = vcombine.low %v3074, %v3076
      %v3093 = vunpack.c.l.s4 1966171168
      %v3094 = vunpack.c.0.s8 %v3093
      %v3095 = vlaneseq
      %v3096 = vshrl.u32 %v3095, 7
      %v3097 = vsub.s32 %v3094, %v3096
      %v3098 = vrot.slane %v3091, %v3097
      %v3099 = vcombine.high %v3098, %v3098
      %v3101 = vunpack.c.l.s4 1966171168
      %v3102 = vunpack.c.0.s8 %v3101
      %v3103 = vlaneseq
      %v3104 = vshrl.u32 %v3103, 7
      %v3105 = vsub.s32 %v3102, %v3104
      %v3106 = vrot.slane %v3098, %v3105
      %v3108 = vunpack.c.l.s4 1966171168
      %v3109 = vunpack.c.0.s8 %v3108
      %v3110 = vlaneseq
      %v3111 = vshrl.u32 %v3110, 7
      %v3112 = vsub.s32 %v3109, %v3111
      %v3113 = vrot.slane %v3099, %v3112
      %v3114 = vcombine.high %v3106, %v3106
      %v3115 = vcombine.high %v3113, %v3113
      %v3116 = vlaneseq
      %v3117 = vshrl.u32 %v3116, 7
      %v3118 = vsub.s32 0, %v3117
      %v3119 = vrot.slane %v3106, %v3118
      %v3120 = vlaneseq
      %v3121 = vshrl.u32 %v3120, 7
      %v3122 = vsub.s32 1, %v3121
      %v3123 = vrot.slane %v3106, %v3122
      %v3124 = vlaneseq
      %v3125 = vshrl.u32 %v3124, 7
      %v3126 = vsub.s32 0, %v3125
      %v3127 = vrot.slane %v3113, %v3126
      %v3128 = vlaneseq
      %v3129 = vshrl.u32 %v3128, 7
      %v3130 = vsub.s32 1, %v3129
      %v3131 = vrot.slane %v3113, %v3130
      %v3132 = vlaneseq
      %v3133 = vshrl.u32 %v3132, 7
      %v3134 = vsub.s32 0, %v3133
      %v3135 = vrot.slane %v3114, %v3134
      %v3136 = vlaneseq
      %v3137 = vshrl.u32 %v3136, 7
      %v3138 = vsub.s32 1, %v3137
      %v3139 = vrot.slane %v3114, %v3138
      %v3140 = vlaneseq
      %v3141 = vshrl.u32 %v3140, 7
      %v3142 = vsub.s32 0, %v3141
      %v3143 = vrot.slane %v3115, %v3142
      %v3144 = vlaneseq
      %v3145 = vshrl.u32 %v3144, 7
      %v3146 = vsub.s32 1, %v3145
      %v3147 = vrot.slane %v3115, %v3146
      %v3156 = vmul.f32 %v2894, %v3119
      %v3157 = vmul.f32 %v2895, %v3123
      %v3158 = vmul.f32 %v2896, %v3127
      %v3159 = vmul.f32 %v2897, %v3131
      %v3160 = vmul.f32 %v2898, %v3135
      %v3161 = vmul.f32 %v2899, %v3139
      %v3162 = vmul.f32 %v2900, %v3143
      %v3163 = vmul.f32 %v2901, %v3147
      %v3166 = vcombine.low %v3087, %v3088
      %v3168 = vunpack.c.l.s4 1966171168
      %v3169 = vunpack.c.0.s8 %v3168
      %v3170 = vlaneseq
      %v3171 = vshrl.u32 %v3170, 7
      %v3172 = vsub.s32 %v3169, %v3171
      %v3173 = vrot.slane %v3166, %v3172
      %v3174 = vcombine.high %v3173, %v3173
      %v3176 = vunpack.c.l.s4 1966171168
      %v3177 = vunpack.c.0.s8 %v3176
      %v3178 = vlaneseq
      %v3179 = vshrl.u32 %v3178, 7
      %v3180 = vsub.s32 %v3177, %v3179
      %v3181 = vrot.slane %v3173, %v3180
      %v3183 = vunpack.c.l.s4 1966171168
      %v3184 = vunpack.c.0.s8 %v3183
      %v3185 = vlaneseq
      %v3186 = vshrl.u32 %v3185, 7
      %v3187 = vsub.s32 %v3184, %v3186
      %v3188 = vrot.slane %v3174, %v3187
      %v3189 = vcombine.high %v3181, %v3181
      %v3190 = vcombine.high %v3188, %v3188
      %v3191 = vlaneseq
      %v3192 = vshrl.u32 %v3191, 7
      %v3193 = vsub.s32 0, %v3192
      %v3194 = vrot.slane %v3181, %v3193
      %v3195 = vlaneseq
      %v3196 = vshrl.u32 %v3195, 7
      %v3197 = vsub.s32 1, %v3196
      %v3198 = vrot.slane %v3181, %v3197
      %v3199 = vlaneseq
      %v3200 = vshrl.u32 %v3199, 7
      %v3201 = vsub.s32 0, %v3200
      %v3202 = vrot.slane %v3188, %v3201
      %v3203 = vlaneseq
      %v3204 = vshrl.u32 %v3203, 7
      %v3205 = vsub.s32 1, %v3204
      %v3206 = vrot.slane %v3188, %v3205
      %v3207 = vlaneseq
      %v3208 = vshrl.u32 %v3207, 7
      %v3209 = vsub.s32 0, %v3208
      %v3210 = vrot.slane %v3189, %v3209
      %v3211 = vlaneseq
      %v3212 = vshrl.u32 %v3211, 7
      %v3213 = vsub.s32 1, %v3212
      %v3214 = vrot.slane %v3189, %v3213
      %v3215 = vlaneseq
      %v3216 = vshrl.u32 %v3215, 7
      %v3217 = vsub.s32 0, %v3216
      %v3218 = vrot.slane %v3190, %v3217
      %v3219 = vlaneseq
      %v3220 = vshrl.u32 %v3219, 7
      %v3221 = vsub.s32 1, %v3220
      %v3222 = vrot.slane %v3190, %v3221
      %v3231 = vmul.f32 %v3194, %v2943
      %v3232 = vmul.f32 %v3198, %v2947
      %v3233 = vmul.f32 %v3202, %v2944
      %v3234 = vmul.f32 %v3206, %v2948
      %v3235 = vmul.f32 %v3210, %v2945
      %v3236 = vmul.f32 %v3214, %v2949
      %v3237 = vmul.f32 %v3218, %v2946
      %v3238 = vmul.f32 %v3222, %v2950
      %v3239 = vadd.f32 %v3156, %v3231
      %v3240 = vadd.f32 %v3157, %v3232
      %v3241 = vadd.f32 %v3158, %v3233
      %v3242 = vadd.f32 %v3159, %v3234
      %v3243 = vadd.f32 %v3160, %v3235
      %v3244 = vadd.f32 %v3161, %v3236
      %v3245 = vadd.f32 %v3162, %v3237
      %v3246 = vadd.f32 %v3163, %v3238
      %v3247 = vrcp.pop %v3085
      %v3248 = vrcp.pop %v3086
      %v3251 = vcombine.low %v3247, %v3248
      %v3253 = vunpack.c.l.s4 1966171168
      %v3254 = vunpack.c.0.s8 %v3253
      %v3255 = vlaneseq
      %v3256 = vshrl.u32 %v3255, 7
      %v3257 = vsub.s32 %v3254, %v3256
      %v3258 = vrot.slane %v3251, %v3257
      %v3259 = vcombine.high %v3258, %v3258
      %v3261 = vunpack.c.l.s4 1966171168
      %v3262 = vunpack.c.0.s8 %v3261
      %v3263 = vlaneseq
      %v3264 = vshrl.u32 %v3263, 7
      %v3265 = vsub.s32 %v3262, %v3264
      %v3266 = vrot.slane %v3258, %v3265
      %v3268 = vunpack.c.l.s4 1966171168
      %v3269 = vunpack.c.0.s8 %v3268
      %v3270 = vlaneseq
      %v3271 = vshrl.u32 %v3270, 7
      %v3272 = vsub.s32 %v3269, %v3271
      %v3273 = vrot.slane %v3259, %v3272
      %v3274 = vcombine.high %v3266, %v3266
      %v3275 = vcombine.high %v3273, %v3273
      %v3276 = vlaneseq
      %v3277 = vshrl.u32 %v3276, 7
      %v3278 = vsub.s32 0, %v3277
      %v3279 = vrot.slane %v3266, %v3278
      %v3280 = vlaneseq
      %v3281 = vshrl.u32 %v3280, 7
      %v3282 = vsub.s32 1, %v3281
      %v3283 = vrot.slane %v3266, %v3282
      %v3284 = vlaneseq
      %v3285 = vshrl.u32 %v3284, 7
      %v3286 = vsub.s32 0, %v3285
      %v3287 = vrot.slane %v3273, %v3286
      %v3288 = vlaneseq
      %v3289 = vshrl.u32 %v3288, 7
      %v3290 = vsub.s32 1, %v3289
      %v3291 = vrot.slane %v3273, %v3290
      %v3292 = vlaneseq
      %v3293 = vshrl.u32 %v3292, 7
      %v3294 = vsub.s32 0, %v3293
      %v3295 = vrot.slane %v3274, %v3294
      %v3296 = vlaneseq
      %v3297 = vshrl.u32 %v3296, 7
      %v3298 = vsub.s32 1, %v3297
      %v3299 = vrot.slane %v3274, %v3298
      %v3300 = vlaneseq
      %v3301 = vshrl.u32 %v3300, 7
      %v3302 = vsub.s32 0, %v3301
      %v3303 = vrot.slane %v3275, %v3302
      %v3304 = vlaneseq
      %v3305 = vshrl.u32 %v3304, 7
      %v3306 = vsub.s32 1, %v3305
      %v3307 = vrot.slane %v3275, %v3306
      %v3316 = vmul.f32 %v3239, %v3279
      %v3317 = vmul.f32 %v3240, %v3283
      %v3318 = vmul.f32 %v3241, %v3287
      %v3319 = vmul.f32 %v3242, %v3291
      %v3320 = vmul.f32 %v3243, %v3295
      %v3321 = vmul.f32 %v3244, %v3299
      %v3322 = vmul.f32 %v3245, %v3303
      %v3323 = vmul.f32 %v3246, %v3307
      %v3332 = vcombine.low %v3316, %v3317
      %v3333 = vcombine.low %v3318, %v3319
      %v3334 = vcombine.low %v3320, %v3321
      %v3335 = vcombine.low %v3322, %v3323
      %3340 = vst [vmem:[%s254] sm:$0xff] %v3332
      %3341 = vst [vmem:[%s254 + $0x8] sm:$0xff] %v3333
      %3342 = vst [vmem:[%s254 + $0x10] sm:$0xff] %v3334
      %3343 = vst [vmem:[%s254 + $0x18] sm:$0xff] %v3335
      %s3344 = smul.u32 4, %s15
      %p3345 = scmp.lt.s32.totalorder %s3344, 7
      %s3346 = scalar_select %p3345, %s3344, 7
      %s3347 = smul.addr %s3346, 2
      %s3348 = smul.addr %s3347, 4
      %s3349 = scalar_lea.vmem %s4, %s3348
      // Predicated region
      $region37: #{dilate_attention.1} parent=35 // pred_check
        %p3350 = pneg %p132
      $region38: #{dilate_attention.1} parent=35 // pred_check_branch
        %3352 = sbr.rel (%p3350) target = $region40
      $region39: #{dilate_attention.1} parent=35 // pred_region
        %s3353 = smul.u32 4, %s15
      $region40: #{dilate_attention.1} parent=35 // pred_fallthru
        _
    $region36: #{dilate_attention.1} parent=5 // pred_fallthru
      _
    %p3354 = scmp.le.s32.totalorder 2, %s10
    // Predicated region
    $region41: #{dilate_attention.1} parent=5 // pred_check
      %p3355 = pneg %p3354
    $region42: #{dilate_attention.1} parent=5 // pred_check_branch
      %3357 = sbr.rel (%p3355) target = $region44
    $region43: #{dilate_attention.1} parent=5 // pred_region
      %s3358 = ssub.s32 %s10, 2
      // Predicated region
      $region45: #{dilate_attention.1} parent=43 // pred_check
        %p3359 = pneg %p138
      $region46: #{dilate_attention.1} parent=43 // pred_check_branch
        %3361 = sbr.rel (%p3359) target = $region48
      $region47: #{dilate_attention.1} parent=43 // pred_region
        %s3362 = smul.u32 4, %s16
        %p3363 = scmp.lt.s32.totalorder %s3362, 7
        %s3364 = scalar_select %p3363, %s3362, 7
        %s3365 = smul.addr %s3364, 2
        %s3366 = smul.addr %s3365, 4
        %s3367 = scalar_lea.vmem %s4, %s3366
      $region48: #{dilate_attention.1} parent=43 // pred_fallthru
        _
    $region44: #{dilate_attention.1} parent=5 // pred_fallthru
      _
  $region6: #{dilate_attention.1} parent=0 // loop_footer
    %s14 = sadd.s32 1, %s10
  $region7: #{dilate_attention.1} parent=0 // loop_footer_branch
    %9 = sbr.rel target = $region3
  $region8: #{dilate_attention.1} parent=0 // loop_exit
    _

</llo_original>
